<compile_context>
chip_gen: v7x
topology: tpu7x:2x2x1
jax: 0.10.0
libtpu: 0.0.40
codegen_flags: <defaults>
</compile_context>

<pallas_src>
import functools

import jax
import jax.numpy as jnp
from jax.experimental import pallas as pl
from jax.experimental.pallas import tpu as pltpu


# Tile sizes: (8,128)-aligned, lane dim a multiple of 128.  Double-buffered
# VMEM footprint ~1 MiB (KG kernel) / ~4 MiB (user kernel) -> fits v5e/v6e/v7x.
ENT_TILE = 256      # entity rows per output tile of the KG kernel
EDGE_TILE = 1024    # edges per reduction step of the KG kernel
USER_TILE = 512     # user rows per output tile of the user kernel
K_TILE = 1024       # entity (reduction) columns per step of the user kernel
LANE = 128
VMEM_LIMIT = 32 * 1024 * 1024
NUM_SPLITS = 2      # split the KG pair list across v7x's two TensorCores


def _round_up(x, m):
    return (x + m - 1) // m * m


# ----------------------------------------------------------------------------
# Kernel 1: KG aggregate (flattened pair grid)
#   entity_agg[h] = mean_{edges e: head[e]==h} entity_emb[tail[e]] * rel_emb[type[e]]
# Grid: (n_splits, max_pairs).  Scalar prefetch (flat SMEM arrays):
#   pent[c*(max_pairs+1)+s]  entity-tile id of pair s on core c (-1 sentinel last)
#   pedge[c*max_pairs+s]     edge-tile id of pair s on core c
#   valid[c*max_pairs+s]     1 if the pair contributes (0 for dummy/pad steps)
# ----------------------------------------------------------------------------
def kg_agg_kernel(pent_ref, pedge_ref, valid_ref,       # scalar prefetch (SMEM)
                  head_ref, neigh_ref, inv_ref,          # inputs (VMEM)
                  out_ref,                                # output (VMEM)
                  acc_ref,                                # scratch (VMEM, f32)
                  *, ent_stride, pair_stride, ent_tile):
    del pedge_ref  # only used by the index_maps
    c = pl.program_id(0)
    s = pl.program_id(1)
    eb = c * ent_stride
    pb = c * pair_stride
    ent_id = pent_ref[eb + s]

    @pl.when((s == 0) | (ent_id != pent_ref[eb + jnp.maximum(s - 1, 0)]))
    def _init():
        acc_ref[...] = jnp.zeros_like(acc_ref)

    @pl.when(valid_ref[pb + s] != 0)
    def _accumulate():
        tm = acc_ref.shape[0]
        te = head_ref.shape[1]
        # Block-local one-hot scatter matrix (never materialised in HBM):
        #   onehot[m, e] = (head[e] - ent_id*ENT_TILE == m)
        rel_head = head_ref[...] - ent_id * ent_tile                 # [1, te]
        rows = jax.lax.broadcasted_iota(jnp.int32, (tm, te), 0)
        onehot = (rows == rel_head).astype(neigh_ref.dtype)          # [tm, te]
        acc_ref[...] += jnp.dot(onehot, neigh_ref[...],
                                preferred_element_type=jnp.float32)

    # Group boundary (next pair belongs to a different entity tile, or the -1
    # sentinel at the end of this core's list): normalise and write out.
    @pl.when(pent_ref[eb + s + 1] != ent_id)
    def _finalize():
        out_ref[...] = (acc_ref[...] * inv_ref[...]).astype(out_ref.dtype)


# ----------------------------------------------------------------------------
# Kernel 2: user aggregate
#   user_agg = (1 + score @ disen_w) * (interact_mat @ entity_emb)
# `gate = score @ disen_w` is precomputed in glue (tiny factor-space math).
# Grid: (user_tiles, k_tiles) with a K reduction over entities.
# ----------------------------------------------------------------------------
def user_agg_kernel(inter_ref, ent_ref, gate_ref, out_ref, acc_ref):
    k = pl.program_id(1)

    @pl.when(k == 0)
    def _init():
        acc_ref[...] = jnp.zeros_like(acc_ref)

    acc_ref[...] += jnp.dot(inter_ref[...], ent_ref[...],
                            preferred_element_type=jnp.float32)

    @pl.when(k == pl.num_programs(1) - 1)
    def _finalize():
        out_ref[...] = ((gate_ref[...].astype(jnp.float32) + 1.0)
                        * acc_ref[...]).astype(out_ref.dtype)


# ----------------------------------------------------------------------------
# Glue: flattened (entity_tile, edge_tile) pair list for tiles [t0, t0+nt)
# ----------------------------------------------------------------------------
def _tile_pairs(lo, cnt, t0, max_pairs):
    nt = cnt.shape[0]
    cntp = jnp.maximum(cnt, 1)             # empty entity tiles get one dummy pair
    cum = jnp.cumsum(cntp)                 # inclusive
    total = cum[-1]
    s = jnp.arange(max_pairs, dtype=jnp.int32)
    grp = jnp.minimum(
        jnp.searchsorted(cum, s, side='right').astype(jnp.int32), nt - 1)
    j = s - (cum[grp] - cntp[grp])
    valid = ((s < total) & (j < cnt[grp])).astype(jnp.int32)
    j = jnp.clip(j, 0, jnp.maximum(cnt[grp] - 1, 0))
    pair_edge = (lo[grp] + j).astype(jnp.int32)
    pair_ent = (grp + t0).astype(jnp.int32)
    # -1 sentinel so the group-boundary test fires the last write on this core.
    pair_ent_ext = jnp.concatenate([pair_ent, jnp.full((1,), -1, jnp.int32)])
    return pair_ent_ext, pair_edge, valid


# ----------------------------------------------------------------------------
# Wrapper
# ----------------------------------------------------------------------------
def aggregator_forward(entity_emb, user_emb, latent_emb, relation_emb,
                       edge_index, edge_type, interact_mat, disen_weight_att,
                       *, mm_dtype=jnp.bfloat16):
    n_entities, emb_dim = entity_emb.shape
    n_users = user_emb.shape[0]
    n_edges = edge_type.shape[0]
    head, tail = edge_index[0], edge_index[1]

    assert K_TILE % ENT_TILE == 0
    d_pad = _round_up(emb_dim, LANE)
    n_ent_pad = _round_up(n_entities, max(ENT_TILE, K_TILE))
    n_user_pad = _round_up(n_users, USER_TILE)
    e_pad = _round_up(n_edges, EDGE_TILE)

    n_ent_tiles = n_ent_pad // ENT_TILE
    n_edge_tiles = e_pad // EDGE_TILE
    n_user_tiles = n_user_pad // USER_TILE
    n_k_tiles = n_ent_pad // K_TILE

    # -------- pad embeddings (lane-dense, tile-aligned) --------
    ent_p = jnp.pad(entity_emb,
                    ((0, n_ent_pad - n_entities), (0, d_pad - emb_dim)))
    rel_p = jnp.pad(relation_emb, ((0, 0), (0, d_pad - emb_dim)))

    # -------- KG glue: sort edges by head, pad with an inert sentinel --------
    order = jnp.argsort(head)
    head_s = head[order].astype(jnp.int32)
    tail_s = tail[order]
    type_s = edge_type[order]

    sentinel = jnp.int32(n_ent_pad)   # matches no entity row -> padding inert
    head_sp = jnp.concatenate(
        [head_s, jnp.full((e_pad - n_edges,), sentinel, jnp.int32)])
    tail_sp = jnp.concatenate(
        [tail_s, jnp.zeros((e_pad - n_edges,), tail_s.dtype)])
    type_sp = jnp.concatenate(
        [type_s, jnp.zeros((e_pad - n_edges,), type_s.dtype)])

    # neigh[e] = entity_emb[tail[e]] * relation_emb[type[e]] (bf16 MXU operand;
    # the one-hot is exact in bf16 and accumulation stays f32 in the kernel).
    neigh = (jnp.take(ent_p, tail_sp, axis=0)
             * jnp.take(rel_p, type_sp, axis=0)).astype(mm_dtype)   # [e_pad, d_pad]
    head_2d = head_sp.reshape(1, e_pad)

    # Precomputed reciprocal in-degree (scatter_mean normalisation).
    counts = jax.ops.segment_sum(jnp.ones((n_edges,), jnp.float32), head,
                                 num_segments=n_entities)
    inv_cnt = 1.0 / jnp.maximum(counts, 1.0)
    inv_cnt = jnp.pad(inv_cnt, (0, n_ent_pad - n_entities)).reshape(n_ent_pad, 1)

    # Per-entity-tile contiguous edge-tile ranges (sorted heads).
    bounds = jnp.arange(n_ent_tiles + 1, dtype=jnp.int32) * ENT_TILE
    pos = jnp.searchsorted(head_sp, bounds, side='left').astype(jnp.int32)
    seg_start, seg_end = pos[:-1], pos[1:]
    lo_all = jnp.minimum(seg_start // EDGE_TILE, n_edge_tiles - 1).astype(jnp.int32)
    cnt_all = jnp.where(seg_end > seg_start,
                        (seg_end - 1) // EDGE_TILE - seg_start // EDGE_TILE + 1,
                        0).astype(jnp.int32)

    # Flattened 1-D pair grid (grouped-matmul pattern), split across cores so
    # v7x's two TensorCores each take half the entity tiles.
    n_splits = NUM_SPLITS if n_ent_tiles >= NUM_SPLITS else 1
    half0 = -(-n_ent_tiles // n_splits)
    max_pairs = n_edge_tiles + half0 - 1         # static bound on pairs per core
    pent_l, pedge_l, valid_l = [], [], []
    for c in range(n_splits):
        t0 = c * half0
        t1 = min((c + 1) * half0, n_ent_tiles)
        pe, pg, va = _tile_pairs(lo_all[t0:t1], cnt_all[t0:t1], t0, max_pairs)
        pent_l.append(pe)
        pedge_l.append(pg)
        valid_l.append(va)
    pent = jnp.stack(pent_l).reshape(-1)         # [n_splits*(max_pairs+1)]
    pedge = jnp.stack(pedge_l).reshape(-1)       # [n_splits*max_pairs]
    valid = jnp.stack(valid_l).reshape(-1)       # [n_splits*max_pairs]

    ent_stride = max_pairs + 1
    pair_stride = max_pairs

    kg_kernel = functools.partial(kg_agg_kernel, ent_stride=ent_stride,
                                  pair_stride=pair_stride, ent_tile=ENT_TILE)

    def head_idx(c, s, pent_r, pedge_r, valid_r):
        return (0, pedge_r[c * pair_stride + s])

    def neigh_idx(c, s, pent_r, pedge_r, valid_r):
        return (pedge_r[c * pair_stride + s], 0)

    def ent_row_idx(c, s, pent_r, pedge_r, valid_r):
        return (pent_r[c * ent_stride + s], 0)

    entity_agg_p = pl.pallas_call(
        kg_kernel,
        out_shape=jax.ShapeDtypeStruct((n_ent_pad, d_pad), jnp.float32),
        grid_spec=pltpu.PrefetchScalarGridSpec(
            num_scalar_prefetch=3,
            grid=(n_splits, max_pairs),
            in_specs=[
                pl.BlockSpec((1, EDGE_TILE), head_idx),
                pl.BlockSpec((EDGE_TILE, d_pad), neigh_idx),
                pl.BlockSpec((ENT_TILE, 1), ent_row_idx),
            ],
            out_specs=pl.BlockSpec((ENT_TILE, d_pad), ent_row_idx),
            scratch_shapes=[pltpu.VMEM((ENT_TILE, d_pad), jnp.float32)]),
        compiler_params=pltpu.CompilerParams(
            dimension_semantics=("parallel", "arbitrary"),
            vmem_limit_bytes=VMEM_LIMIT),
    )(pent, pedge, valid, head_2d, neigh, inv_cnt)

    entity_agg = entity_agg_p[:n_entities, :emb_dim]

    # -------- user kernel glue (tiny factor-space math stays in XLA) --------
    score = jax.nn.softmax(user_emb @ latent_emb.T, axis=1)              # [U, F]
    disen_w = jax.nn.softmax(disen_weight_att, axis=-1) @ relation_emb   # [F, D]
    gate = score @ disen_w                                               # [U, D]
    gate_p = jnp.pad(gate, ((0, n_user_pad - n_users), (0, d_pad - emb_dim)))

    # TODO(synk): for a truly sparse interact_mat, prefetch per-user-tile lists
    # of non-empty K tiles (same pair-list trick as the KG kernel) and skip
    # all-zero blocks instead of a dense U x E matmul.
    inter_p = jnp.pad(interact_mat,
                      ((0, n_user_pad - n_users),
                       (0, n_ent_pad - n_entities))).astype(mm_dtype)
    ent_mm = ent_p.astype(mm_dtype)

    user_agg_p = pl.pallas_call(
        user_agg_kernel,
        out_shape=jax.ShapeDtypeStruct((n_user_pad, d_pad), jnp.float32),
        grid_spec=pltpu.PrefetchScalarGridSpec(
            num_scalar_prefetch=0,
            grid=(n_user_tiles, n_k_tiles),
            in_specs=[
                pl.BlockSpec((USER_TILE, K_TILE), lambda i, k: (i, k)),
                pl.BlockSpec((K_TILE, d_pad), lambda i, k: (k, 0)),
                pl.BlockSpec((USER_TILE, d_pad), lambda i, k: (i, 0)),
            ],
            out_specs=pl.BlockSpec((USER_TILE, d_pad), lambda i, k: (i, 0)),
            scratch_shapes=[pltpu.VMEM((USER_TILE, d_pad), jnp.float32)]),
        compiler_params=pltpu.CompilerParams(
            dimension_semantics=("parallel", "arbitrary"),
            vmem_limit_bytes=VMEM_LIMIT),
    )(inter_p, ent_mm, gate_p)

    user_agg = user_agg_p[:n_users, :emb_dim]

    return entity_agg, user_agg


# ----------------------------------------------------------------------------
# Pure-JAX reference (mirrors the PyTorch module)
# ----------------------------------------------------------------------------
def aggregator_reference(entity_emb, user_emb, latent_emb, relation_emb,
                         edge_index, edge_type, interact_mat, disen_weight_att):
    n_entities = entity_emb.shape[0]
    head, tail = edge_index[0], edge_index[1]
    neigh = entity_emb[tail] * relation_emb[edge_type]
    summed = jax.ops.segment_sum(neigh, head, num_segments=n_entities)
    counts = jax.ops.segment_sum(jnp.ones_like(head, dtype=jnp.float32),
                                 head, num_segments=n_entities)
    entity_agg = summed / jnp.maximum(counts, 1.0)[:, None]

    score = jax.nn.softmax(user_emb @ latent_emb.T, axis=1)
    user_agg = interact_mat @ entity_emb
    disen_w = jax.nn.softmax(disen_weight_att, axis=-1) @ relation_emb
    user_agg = (score @ disen_w) * user_agg + user_agg
    return entity_agg, user_agg


# ----------------------------------------------------------------------------
if __name__ == "__main__":
    key = jax.random.PRNGKey(0)
    k = jax.random.split(key, 8)

    # Small shapes, but large enough that every grid axis takes >= 2 steps
    # (pair-list splits & pairs, user tiles, K tiles) so the tiling is exercised.
    n_entities, n_users, n_factors, n_relations = 1500, 700, 4, 8
    n_edges, emb_dim = 3000, 64

    entity_emb = jax.random.normal(k[0], (n_entities, emb_dim), jnp.float32)
    user_emb = jax.random.normal(k[1], (n_users, emb_dim), jnp.float32)
    latent_emb = jax.random.normal(k[2], (n_factors, emb_dim), jnp.float32)
    relation_emb = jax.random.normal(k[3], (n_relations, emb_dim), jnp.float32)
    disen_weight_att = jax.random.normal(k[4], (n_factors, n_relations),
                                         jnp.float32)
    # dense 0/1 stand-in for the sparse user-entity interaction matrix
    interact_mat = (jax.random.uniform(k[5], (n_users, n_entities)) < 0.2
                    ).astype(jnp.float32)
    edge_index = jax.random.randint(k[6], (2, n_edges), 0, n_entities,
                                    dtype=jnp.int32)
    edge_type = jax.random.randint(k[7], (n_edges,), 0, n_relations,
                                   dtype=jnp.int32)

    ref_entity_agg, ref_user_agg = aggregator_reference(
        entity_emb, user_emb, latent_emb, relation_emb,
        edge_index, edge_type, interact_mat, disen_weight_att)

    # ---- f32 MXU-operand path (exact semantics) ----
    entity_agg, user_agg = aggregator_forward(
        entity_emb, user_emb, latent_emb, relation_emb,
        edge_index, edge_type, interact_mat, disen_weight_att,
        mm_dtype=jnp.float32)
    jax.block_until_ready((entity_agg, user_agg))
    assert jnp.allclose(entity_agg, ref_entity_agg, atol=1e-3, rtol=1e-3)
    assert jnp.allclose(user_agg, ref_user_agg, atol=1e-3, rtol=1e-3)

    # ---- default bf16 MXU-operand path (f32 accumulation), looser check ----
    entity_agg_bf, user_agg_bf = aggregator_forward(
        entity_emb, user_emb, latent_emb, relation_emb,
        edge_index, edge_type, interact_mat, disen_weight_att)
    jax.block_until_ready((entity_agg_bf, user_agg_bf))
    rel_e = (jnp.linalg.norm(entity_agg_bf - ref_entity_agg)
             / jnp.maximum(jnp.linalg.norm(ref_entity_agg), 1e-6))
    rel_u = (jnp.linalg.norm(user_agg_bf - ref_user_agg)
             / jnp.maximum(jnp.linalg.norm(ref_user_agg), 1e-6))
    assert rel_e < 2e-2 and rel_u < 2e-2

    print("KERNEL_OK")
</pallas_src>

<mosaic_0001>
module attributes {stable_mosaic.version = 11 : i64} {
  func.func @kg_agg_kernel(%arg0: i32, %arg1: i32, %arg2: memref<14xi32, #tpu.memory_space<smem>>, %arg3: memref<12xi32, #tpu.memory_space<smem>>, %arg4: memref<12xi32, #tpu.memory_space<smem>>, %arg5: memref<1x1024xi32, #tpu.memory_space<vmem>>, %arg6: memref<1024x128xf32, #tpu.memory_space<vmem>>, %arg7: memref<256x1xf32, #tpu.memory_space<vmem>>, %arg8: memref<256x128xf32, #tpu.memory_space<vmem>>, %arg9: memref<256x128xf32, #tpu.memory_space<vmem>>) attributes {dimension_semantics = [#tpu.dimension_semantics<parallel>, #tpu.dimension_semantics<arbitrary>], iteration_bounds = array<i64: 2, 6>, scalar_prefetch = 3 : i64, scratch_operands = 1 : i64, tpu.core_type = #tpu.core_type<tc>, window_params = [{transform_indices = @transform_0, window_bounds = array<i64: 1, 1024>}, {transform_indices = @transform_1, window_bounds = array<i64: 1024, 128>}, {transform_indices = @transform_2, window_bounds = array<i64: 256, 1>}, {transform_indices = @transform_3, window_bounds = array<i64: 256, 128>}]} {
    %c7_i32 = arith.constant 7 : i32
    %0 = arith.muli %arg0, %c7_i32 : i32
    %c6_i32 = arith.constant 6 : i32
    %1 = arith.muli %arg0, %c6_i32 : i32
    %2 = arith.addi %0, %arg1 : i32
    %3 = arith.index_cast %2 : i32 to index
    %4 = memref.load %arg2[%3] : memref<14xi32, #tpu.memory_space<smem>>
    %c0_i32 = arith.constant 0 : i32
    %5 = arith.cmpi eq, %arg1, %c0_i32 : i32
    %c1_i32 = arith.constant 1 : i32
    %6 = arith.subi %arg1, %c1_i32 : i32
    %c0_i32_0 = arith.constant 0 : i32
    %7 = arith.maxsi %6, %c0_i32_0 : i32
    %8 = arith.addi %0, %7 : i32
    %9 = arith.index_cast %8 : i32 to index
    %10 = memref.load %arg2[%9] : memref<14xi32, #tpu.memory_space<smem>>
    %11 = arith.cmpi ne, %4, %10 : i32
    %12 = arith.ori %5, %11 : i1
    %13 = arith.extui %12 : i1 to i32
    %c0_i32_1 = arith.constant 0 : i32
    %14 = arith.cmpi ne, %13, %c0_i32_1 : i32
    scf.if %14 {
      %cst = arith.constant 0.000000e+00 : f32
      %28 = vector.broadcast %cst : f32 to vector<256x128xf32>
      %c0 = arith.constant 0 : index
      %c0_6 = arith.constant 0 : index
      %29 = vector.load %arg9[%c0, %c0_6] : memref<256x128xf32, #tpu.memory_space<vmem>>, vector<256x128xf32>
      tpu.vector_store %arg9[%c0, %c0_6], %28 {strides = array<i32>} : memref<256x128xf32, #tpu.memory_space<vmem>>, vector<256x128xf32>,
    } else {
    }
    %15 = arith.addi %1, %arg1 : i32
    %16 = arith.index_cast %15 : i32 to index
    %17 = memref.load %arg4[%16] : memref<12xi32, #tpu.memory_space<smem>>
    %c0_i32_2 = arith.constant 0 : i32
    %18 = arith.cmpi ne, %17, %c0_i32_2 : i32
    %19 = arith.extui %18 : i1 to i32
    %c0_i32_3 = arith.constant 0 : i32
    %20 = arith.cmpi ne, %19, %c0_i32_3 : i32
    scf.if %20 {
      %c0 = arith.constant 0 : index
      %c0_6 = arith.constant 0 : index
      %28 = vector.load %arg5[%c0, %c0_6] : memref<1x1024xi32, #tpu.memory_space<vmem>>, vector<1x1024xi32>
      %c256_i32 = arith.constant 256 : i32
      %29 = arith.muli %4, %c256_i32 : i32
      %30 = vector.broadcast %29 : i32 to vector<1x1024xi32>
      %31 = arith.subi %28, %30 : vector<1x1024xi32>
      %32 = tpu.iota {dimensions = array<i32: 0>} : vector<256x1024xi32>
      %33 = vector.broadcast %31 : vector<1x1024xi32> to vector<256x1024xi32>
      %34 = arith.cmpi eq, %32, %33 : vector<256x1024xi32>
      %35 = arith.extui %34 : vector<256x1024xi1> to vector<256x1024xi32>
      %36 = arith.sitofp %35 : vector<256x1024xi32> to vector<256x1024xf32>
      %c0_7 = arith.constant 0 : index
      %c0_8 = arith.constant 0 : index
      %37 = vector.load %arg9[%c0_7, %c0_8] : memref<256x128xf32, #tpu.memory_space<vmem>>, vector<256x128xf32>
      %c0_9 = arith.constant 0 : index
      %c0_10 = arith.constant 0 : index
      %38 = vector.load %arg6[%c0_9, %c0_10] : memref<1024x128xf32, #tpu.memory_space<vmem>>, vector<1024x128xf32>
      %cst = arith.constant dense<0.000000e+00> : vector<256x128xf32>
      %39 = tpu.matmul %36, %38, %cst {dimension_numbers = #tpu.dot_dimension_numbers<[1], [0], [0], [1], [0, 0, 1, 1], [], []>} : vector<256x1024xf32>, vector<1024x128xf32>, vector<256x128xf32> -> vector<256x128xf32>
      %40 = arith.addf %37, %39 : vector<256x128xf32>
      %c0_11 = arith.constant 0 : index
      %c0_12 = arith.constant 0 : index
      %41 = vector.load %arg9[%c0_11, %c0_12] : memref<256x128xf32, #tpu.memory_space<vmem>>, vector<256x128xf32>
      tpu.vector_store %arg9[%c0_11, %c0_12], %40 {strides = array<i32>} : memref<256x128xf32, #tpu.memory_space<vmem>>, vector<256x128xf32>,
    } else {
    }
    %21 = arith.addi %0, %arg1 : i32
    %c1_i32_4 = arith.constant 1 : i32
    %22 = arith.addi %21, %c1_i32_4 : i32
    %23 = arith.index_cast %22 : i32 to index
    %24 = memref.load %arg2[%23] : memref<14xi32, #tpu.memory_space<smem>>
    %25 = arith.cmpi ne, %24, %4 : i32
    %26 = arith.extui %25 : i1 to i32
    %c0_i32_5 = arith.constant 0 : i32
    %27 = arith.cmpi ne, %26, %c0_i32_5 : i32
    scf.if %27 {
      %c0 = arith.constant 0 : index
      %c0_6 = arith.constant 0 : index
      %28 = vector.load %arg9[%c0, %c0_6] : memref<256x128xf32, #tpu.memory_space<vmem>>, vector<256x128xf32>
      %c0_7 = arith.constant 0 : index
      %c0_8 = arith.constant 0 : index
      %29 = vector.load %arg7[%c0_7, %c0_8] : memref<256x1xf32, #tpu.memory_space<vmem>>, vector<256x1xf32>
      %30 = vector.broadcast %29 : vector<256x1xf32> to vector<256x128xf32>
      %31 = arith.mulf %28, %30 : vector<256x128xf32>
      %c0_9 = arith.constant 0 : index
      %c0_10 = arith.constant 0 : index
      %32 = vector.load %arg8[%c0_9, %c0_10] : memref<256x128xf32, #tpu.memory_space<vmem>>, vector<256x128xf32>
      tpu.vector_store %arg8[%c0_9, %c0_10], %31 {strides = array<i32>} : memref<256x128xf32, #tpu.memory_space<vmem>>, vector<256x128xf32>,
    } else {
    }
    return
  }
  func.func @transform_0(%arg0: i32, %arg1: i32, %arg2: memref<14xi32, #tpu.memory_space<smem>>, %arg3: memref<12xi32, #tpu.memory_space<smem>>, %arg4: memref<12xi32, #tpu.memory_space<smem>>) -> (i32, i32) {
    %c6_i32 = arith.constant 6 : i32
    %0 = arith.muli %arg0, %c6_i32 : i32
    %1 = arith.addi %0, %arg1 : i32
    %2 = arith.index_cast %1 : i32 to index
    %3 = memref.load %arg3[%2] : memref<12xi32, #tpu.memory_space<smem>>
    %c0_i32 = arith.constant 0 : i32
    %c0_i32_0 = arith.constant 0 : i32
    return %c0_i32, %3 : i32, i32
  }
  func.func @transform_1(%arg0: i32, %arg1: i32, %arg2: memref<14xi32, #tpu.memory_space<smem>>, %arg3: memref<12xi32, #tpu.memory_space<smem>>, %arg4: memref<12xi32, #tpu.memory_space<smem>>) -> (i32, i32) {
    %c6_i32 = arith.constant 6 : i32
    %0 = arith.muli %arg0, %c6_i32 : i32
    %1 = arith.addi %0, %arg1 : i32
    %2 = arith.index_cast %1 : i32 to index
    %3 = memref.load %arg3[%2] : memref<12xi32, #tpu.memory_space<smem>>
    %c0_i32 = arith.constant 0 : i32
    %c0_i32_0 = arith.constant 0 : i32
    return %3, %c0_i32 : i32, i32
  }
  func.func @transform_2(%arg0: i32, %arg1: i32, %arg2: memref<14xi32, #tpu.memory_space<smem>>, %arg3: memref<12xi32, #tpu.memory_space<smem>>, %arg4: memref<12xi32, #tpu.memory_space<smem>>) -> (i32, i32) {
    %c7_i32 = arith.constant 7 : i32
    %0 = arith.muli %arg0, %c7_i32 : i32
    %1 = arith.addi %0, %arg1 : i32
    %2 = arith.index_cast %1 : i32 to index
    %3 = memref.load %arg2[%2] : memref<14xi32, #tpu.memory_space<smem>>
    %c0_i32 = arith.constant 0 : i32
    %c0_i32_0 = arith.constant 0 : i32
    return %3, %c0_i32 : i32, i32
  }
  func.func @transform_3(%arg0: i32, %arg1: i32, %arg2: memref<14xi32, #tpu.memory_space<smem>>, %arg3: memref<12xi32, #tpu.memory_space<smem>>, %arg4: memref<12xi32, #tpu.memory_space<smem>>) -> (i32, i32) {
    %c7_i32 = arith.constant 7 : i32
    %0 = arith.muli %arg0, %c7_i32 : i32
    %1 = arith.addi %0, %arg1 : i32
    %2 = arith.index_cast %1 : i32 to index
    %3 = memref.load %arg2[%2] : memref<14xi32, #tpu.memory_space<smem>>
    %c0_i32 = arith.constant 0 : i32
    %c0_i32_0 = arith.constant 0 : i32
    return %3, %c0_i32 : i32, i32
  }
}

</mosaic_0001>

<llo_original>
// kernel: tpu_custom_call.1
$region0: #{tpu_custom_call.1}
  #allocation0 [shape = 'u32[]', space=smem, size = 0x4, offset = 0x4, fixed_abs, tag = 'smem constant byte address 0x4 - core index']
  #allocation1 [shape = 'u32[144,128]{1,0:T(1,128)}', space=vmem, size = 0x12000, scoped, tag = 'internal scratch']
  #allocation2 [shape = 'f32[256,128]{1,0:T(8,128)}', space=vmem, size = 0x20000, scoped, tag = 'scratch operand']
  #allocation3 [shape = 's32[1]{0}', space=sflag, size = 0x4, scoped, tag = 'scoped memory for tpu_custom_call.1']
  #allocation4 [shape = 'u8[512]{0}', space=smem, size = 0x200, scoped, tag = 'prefetched SMEM operand 0']
  #allocation5 [shape = 'u8[512]{0}', space=smem, size = 0x200, scoped, tag = 'prefetched SMEM operand 1']
  #allocation6 [shape = 'u8[512]{0}', space=smem, size = 0x200, scoped, tag = 'prefetched SMEM operand 2']
  %s0 = inlined_call_operand.hbm [shape: s32[14], index: 0, kind: input, shape index: {}]
  %s1 = inlined_call_operand.hbm [shape: s32[12], index: 1, kind: input, shape index: {}]
  %s2 = inlined_call_operand.hbm [shape: s32[12], index: 2, kind: input, shape index: {}]
  %s3 = inlined_call_operand.hbm [shape: s32[1,3072], index: 3, kind: input, shape index: {}]
  %s4 = inlined_call_operand.hbm [shape: f32[3072,128], index: 4, kind: input, shape index: {}]
  %s5 = inlined_call_operand.vmem [shape: f32[2048,1], index: 5, kind: input, shape index: {}]
  %s6 = inlined_call_operand.hbm [shape: f32[2048,128], index: 6, kind: output, shape index: {}]
  %s7 = sld [smem:[#allocation0]]
  $region65: #{tpu_custom_call.1} parent=0
    _
  %s9 = ssub.s32 1, %s7
  %s10 = scalar_select 0, %s9, %s7
  %12 = dma.hbm_to_smem %s0, 16, [#allocation4], [#allocation3]
  %14 = dma.hbm_to_smem %s1, 16, [#allocation5], [#allocation3]
  %16 = dma.hbm_to_smem %s2, 16, [#allocation6], [#allocation3]
  %17 = dma.done [#allocation3], 48
  %18 = sfence
  $region1: #{tpu_custom_call.1} parent=0
    #allocation7 [shape = 'u8[8192]{0}', space=vmem, size = 0x2000, scoped, tag = 'input window, operand 3']
    #allocation8 [shape = 's32[2]{0}', space=sflag, size = 0x8, scoped, tag = 'scoped memory for tpu_custom_call.1']
    #allocation9 [shape = 's32[2]{0}', space=sflag, size = 0x8, scoped, tag = 'scoped memory for tpu_custom_call.1']
    #allocation10 [shape = 'u8[1048576]{0}', space=vmem, size = 0x100000, scoped, tag = 'input window, operand 4']
    #allocation11 [shape = 's32[2]{0}', space=sflag, size = 0x8, scoped, tag = 'scoped memory for tpu_custom_call.1']
    #allocation12 [shape = 'u8[262144]{0}', space=vmem, size = 0x40000, scoped, tag = 'output window, operand 0']
    %19 = vsyncpa [#allocation8], 0
    %s20 = scalar_lea.sflag [#allocation8], 1
    %21 = vsyncpa %s20, 0
    %22 = vsyncpa [#allocation11], 0
    %s23 = scalar_lea.sflag [#allocation11], 1
    %24 = vsyncpa %s23, 0
    %25 = vsyncpa [#allocation9], 0
    %s26 = scalar_lea.sflag [#allocation9], 1
    %27 = vsyncpa %s26, 0
    loop: start=0, step=1, limit=14
    $region2: #{tpu_custom_call.1} parent=1 // loop_pre_header
      _
    $region3: #{tpu_custom_call.1} parent=1 // loop_header
      %s29 = sphi 0, %s33
      %p30 = scmp.ge.s32.totalorder %s29, 14
      %s36 = sphi 0, %s48
      %s37 = sphi 0, %s44
      %s38 = sphi 0, %s36
      %s39 = sphi 0, %s37
      %s40 = sphi 0, %s38
      %s41 = sphi 0, %s39
      %s57 = sphi 0, %s59
      %s60 = sphi 0, %s57
      %s61 = sphi 0, %s60
      %s77 = sphi 0, %s61
      %s89 = sphi 0, %s91
      %s92 = sphi 0, %s89
      %s93 = sphi 0, %s92
      %s109 = sphi 0, %s93
      %s121 = sphi 0, %s123
      %s124 = sphi 0, %s121
      %s125 = sphi 0, %s124
      %s141 = sphi 0, %s125
      %s153 = sphi 0, %s155
      %s156 = sphi 0, %s153
      %s157 = sphi 0, %s156
      %s173 = sphi 0, %s157
    $region4: #{tpu_custom_call.1} parent=1 // loop_header_branch
      %32 = sbr.rel (%p30) target = $region8
    $region5: #{tpu_custom_call.1} parent=1 // loop_body
      %s34 = ssub.s32 %s29, 1
      %s35 = ssub.s32 %s29, 2
      %s42 = sadd.s32 1, %s37
      %p43 = scmp.ge.s32.totalorder %s42, 6
      %s44 = scalar_select %p43, 0, %s42
      %s45 = sadd.s32 1, %s36
      %s46 = scalar_select %p43, %s45, %s36
      %p47 = scmp.ge.s32.totalorder %s46, 2
      %s48 = scalar_select %p47, 0, %s46
      %s49 = smul.u32 %s36, 6
      %s50 = sadd.s32 %s49, %s37
      %s51 = sld [smem:[#allocation5 + %s50]]
      %s52 = smul.u32 %s48, 6
      %s53 = sadd.s32 %s52, %s44
      %s54 = sld [smem:[#allocation5 + %s53]]
      %s55 = ssub.s32 %s51, %s54
      %p56 = scmp.eq.s32.totalorder %s55, 0
      %s58 = sadd.s32 %s57, 1
      %s59 = scalar_select %p56, %s57, %s58
      %p62 = pneg %p56
      %p63 = scmp.eq.s32.totalorder %s29, 11
      %p64 = por %p62, %p63
      %p65 = scmp.ne.s32.totalorder %s57, %s60
      %p66 = scmp.eq.s32.totalorder %s29, 0
      %p67 = por %p65, %p66
      %p68 = scmp.ne.s32.totalorder %s57, %s60
      %p69 = scmp.eq.s32.totalorder %s34, 11
      %p70 = por %p68, %p69
      %p71 = scmp.ne.s32.totalorder %s60, %s61
      %p72 = scmp.eq.s32.totalorder %s34, 0
      %p73 = por %p71, %p72
      %p74 = scmp.ne.s32.totalorder %s60, %s61
      %p75 = scmp.eq.s32.totalorder %s35, 11
      %p76 = por %p74, %p75
      %p78 = scmp.ne.s32.totalorder %s61, %s77
      %p79 = scmp.eq.s32.totalorder %s35, 0
      %p80 = por %p78, %p79
      %s81 = smul.u32 %s36, 6
      %s82 = sadd.s32 %s81, %s37
      %s83 = sld [smem:[#allocation5 + %s82]]
      %s84 = smul.u32 %s48, 6
      %s85 = sadd.s32 %s84, %s44
      %s86 = sld [smem:[#allocation5 + %s85]]
      %s87 = ssub.s32 %s83, %s86
      %p88 = scmp.eq.s32.totalorder %s87, 0
      %s90 = sadd.s32 %s89, 1
      %s91 = scalar_select %p88, %s89, %s90
      %p94 = pneg %p88
      %p95 = scmp.eq.s32.totalorder %s29, 11
      %p96 = por %p94, %p95
      %p97 = scmp.ne.s32.totalorder %s89, %s92
      %p98 = scmp.eq.s32.totalorder %s29, 0
      %p99 = por %p97, %p98
      %p100 = scmp.ne.s32.totalorder %s89, %s92
      %p101 = scmp.eq.s32.totalorder %s34, 11
      %p102 = por %p100, %p101
      %p103 = scmp.ne.s32.totalorder %s92, %s93
      %p104 = scmp.eq.s32.totalorder %s34, 0
      %p105 = por %p103, %p104
      %p106 = scmp.ne.s32.totalorder %s92, %s93
      %p107 = scmp.eq.s32.totalorder %s35, 11
      %p108 = por %p106, %p107
      %p110 = scmp.ne.s32.totalorder %s93, %s109
      %p111 = scmp.eq.s32.totalorder %s35, 0
      %p112 = por %p110, %p111
      %s113 = smul.u32 %s36, 7
      %s114 = sadd.s32 %s113, %s37
      %s115 = sld [smem:[#allocation4 + %s114]]
      %s116 = smul.u32 %s48, 7
      %s117 = sadd.s32 %s116, %s44
      %s118 = sld [smem:[#allocation4 + %s117]]
      %s119 = ssub.s32 %s115, %s118
      %p120 = scmp.eq.s32.totalorder %s119, 0
      %s122 = sadd.s32 %s121, 1
      %s123 = scalar_select %p120, %s121, %s122
      %p126 = pneg %p120
      %p127 = scmp.eq.s32.totalorder %s29, 11
      %p128 = por %p126, %p127
      %p129 = scmp.ne.s32.totalorder %s121, %s124
      %p130 = scmp.eq.s32.totalorder %s29, 0
      %p131 = por %p129, %p130
      %p132 = scmp.ne.s32.totalorder %s121, %s124
      %p133 = scmp.eq.s32.totalorder %s34, 11
      %p134 = por %p132, %p133
      %p135 = scmp.ne.s32.totalorder %s124, %s125
      %p136 = scmp.eq.s32.totalorder %s34, 0
      %p137 = por %p135, %p136
      %p138 = scmp.ne.s32.totalorder %s124, %s125
      %p139 = scmp.eq.s32.totalorder %s35, 11
      %p140 = por %p138, %p139
      %p142 = scmp.ne.s32.totalorder %s125, %s141
      %p143 = scmp.eq.s32.totalorder %s35, 0
      %p144 = por %p142, %p143
      %s145 = smul.u32 %s36, 7
      %s146 = sadd.s32 %s145, %s37
      %s147 = sld [smem:[#allocation4 + %s146]]
      %s148 = smul.u32 %s48, 7
      %s149 = sadd.s32 %s148, %s44
      %s150 = sld [smem:[#allocation4 + %s149]]
      %s151 = ssub.s32 %s147, %s150
      %p152 = scmp.eq.s32.totalorder %s151, 0
      %s154 = sadd.s32 %s153, 1
      %s155 = scalar_select %p152, %s153, %s154
      %p158 = pneg %p152
      %p159 = scmp.eq.s32.totalorder %s29, 11
      %p160 = por %p158, %p159
      %p161 = scmp.ne.s32.totalorder %s153, %s156
      %p162 = scmp.eq.s32.totalorder %s29, 0
      %p163 = por %p161, %p162
      %p164 = scmp.ne.s32.totalorder %s153, %s156
      %p165 = scmp.eq.s32.totalorder %s34, 11
      %p166 = por %p164, %p165
      %p167 = scmp.ne.s32.totalorder %s156, %s157
      %p168 = scmp.eq.s32.totalorder %s34, 0
      %p169 = por %p167, %p168
      %p170 = scmp.ne.s32.totalorder %s156, %s157
      %p171 = scmp.eq.s32.totalorder %s35, 11
      %p172 = por %p170, %p171
      %p174 = scmp.ne.s32.totalorder %s157, %s173
      %p175 = scmp.eq.s32.totalorder %s35, 0
      %p176 = por %p174, %p175
      %p177 = scmp.le.s32.totalorder 1, %s29
      %p178 = scmp.lt.s32.totalorder %s29, 13
      %p179 = pnand %p177, %p178
      %p180 = pneg %p179
      // Predicated region
      $region9: #{tpu_custom_call.1} parent=5 // pred_check
        _
      $region10: #{tpu_custom_call.1} parent=5 // pred_check_branch
        %182 = sbr.rel (%p179) target = $region12
      $region11: #{tpu_custom_call.1} parent=5 // pred_region
        %s183 = ssub.s32 %s29, 1
      $region12: #{tpu_custom_call.1} parent=5 // pred_fallthru
        _
      %p184 = scmp.lt.s32.totalorder %s29, 12
      // Predicated region
      $region13: #{tpu_custom_call.1} parent=5 // pred_check
        %p185 = pneg %p184
      $region14: #{tpu_custom_call.1} parent=5 // pred_check_branch
        %187 = sbr.rel (%p185) target = $region16
      $region15: #{tpu_custom_call.1} parent=5 // pred_region
        // Predicated region
        $region17: #{tpu_custom_call.1} parent=15 // pred_check
          %p188 = pneg %p67
        $region18: #{tpu_custom_call.1} parent=15 // pred_check_branch
          %190 = sbr.rel (%p188) target = $region20
        $region19: #{tpu_custom_call.1} parent=15 // pred_region
          %s191 = sand.u32 %s57, 1
          %s192 = scalar_lea.sflag [#allocation8], %s191
          %s193 = sand.u32 %s57, 1
          %s194 = smul.addr %s193, 8
          %s195 = scalar_lea.vmem [#allocation7], %s194
          %s196 = smul.u32 %s36, 6
          %s197 = sadd.s32 %s196, %s37
          %s198 = sld [smem:[#allocation5 + %s197]]
          %s199 = smul.u32 8, %s198
          %s201 = ssub.s32 128, 128
          %202 = vsyncadd %s192, %s201
          %s203 = smul.addr %s199, 16
          %s204 = scalar_lea.hbm %s3, %s203
          %s206 = sshll.u32 %s195, 4
          %s207 = int_to_ptr.vmem [resolvable:$true] %s206
          %209 = dma.hbm_to_vmem [thread:$0]  %s204, 128, %s207, %s192
        $region20: #{tpu_custom_call.1} parent=15 // pred_fallthru
          _
        // Predicated region
        $region21: #{tpu_custom_call.1} parent=15 // pred_check
          %p210 = pneg %p99
        $region22: #{tpu_custom_call.1} parent=15 // pred_check_branch
          %212 = sbr.rel (%p210) target = $region24
        $region23: #{tpu_custom_call.1} parent=15 // pred_region
          %s213 = sand.u32 %s89, 1
          %s214 = scalar_lea.sflag [#allocation11], %s213
          %s215 = sand.u32 %s89, 1
          %s216 = smul.addr %s215, 1024
          %s217 = scalar_lea.vmem [#allocation10], %s216
          %s218 = smul.u32 %s36, 6
          %s219 = sadd.s32 %s218, %s37
          %s220 = sld [smem:[#allocation5 + %s219]]
          %s221 = smul.u32 128, %s220
          %s223 = ssub.s32 16384, 16384
          %224 = vsyncadd %s214, %s223
          %s225 = smul.addr %s221, 128
          %s226 = scalar_lea.hbm %s4, %s225
          %s227 = sshll.u32 %s217, 4
          %s228 = int_to_ptr.vmem [resolvable:$true] %s227
          %233 = dma.hbm_to_vmem [thread:$0]  %s226, 16384, %s228, %s214, 128, 128, 8
        $region24: #{tpu_custom_call.1} parent=15 // pred_fallthru
          _
        // Predicated region
        $region25: #{tpu_custom_call.1} parent=15 // pred_check
          %p234 = pneg %p131
        $region26: #{tpu_custom_call.1} parent=15 // pred_check_branch
          %236 = sbr.rel (%p234) target = $region28
        $region27: #{tpu_custom_call.1} parent=15 // pred_region
          %s237 = smul.u32 %s36, 7
          %s238 = sadd.s32 %s237, %s37
          %s239 = sld [smem:[#allocation4 + %s238]]
          %s240 = smul.u32 32, %s239
          %p241 = scmp.lt.s32.totalorder %s240, 255
          %s242 = scalar_select %p241, %s240, 255
          %s243 = smul.addr %s242, 8
          %s244 = scalar_lea.vmem %s5, %s243
          %s245 = smul.u32 %s36, 7
          %s246 = sadd.s32 %s245, %s37
          %s247 = sld [smem:[#allocation4 + %s246]]
          %s248 = smul.u32 32, %s247
        $region28: #{tpu_custom_call.1} parent=15 // pred_fallthru
          _
      $region16: #{tpu_custom_call.1} parent=5 // pred_fallthru
        _
      %p249 = scmp.le.s32.totalorder 1, %s29
      %p250 = scmp.lt.s32.totalorder %s29, 13
      %p251 = pnand %p249, %p250
      %p252 = pneg %p251
      // Predicated region
      $region29: #{tpu_custom_call.1} parent=5 // pred_check
        _
      $region30: #{tpu_custom_call.1} parent=5 // pred_check_branch
        %254 = sbr.rel (%p251) target = $region32
      $region31: #{tpu_custom_call.1} parent=5 // pred_region
        %s255 = ssub.s32 %s29, 1
        %s256 = sand.u32 %s60, 1
        %s257 = scalar_lea.sflag [#allocation8], %s256
        %s258 = sand.u32 %s60, 1
        %s259 = smul.addr %s258, 8
        %s260 = scalar_lea.vmem [#allocation7], %s259
        // Predicated region
        $region33: #{tpu_custom_call.1} parent=31 // pred_check
          %p261 = pneg %p73
        $region34: #{tpu_custom_call.1} parent=31 // pred_check_branch
          %263 = sbr.rel (%p261) target = $region36
        $region35: #{tpu_custom_call.1} parent=31 // pred_region
          %264 = dma.done %s257, 128
        $region36: #{tpu_custom_call.1} parent=31 // pred_fallthru
          _
        %s265 = sand.u32 %s92, 1
        %s266 = scalar_lea.sflag [#allocation11], %s265
        %s267 = sand.u32 %s92, 1
        %s268 = smul.addr %s267, 1024
        %s269 = scalar_lea.vmem [#allocation10], %s268
        // Predicated region
        $region37: #{tpu_custom_call.1} parent=31 // pred_check
          %p270 = pneg %p105
        $region38: #{tpu_custom_call.1} parent=31 // pred_check_branch
          %272 = sbr.rel (%p270) target = $region40
        $region39: #{tpu_custom_call.1} parent=31 // pred_region
          %273 = dma.done %s266, 16384
        $region40: #{tpu_custom_call.1} parent=31 // pred_fallthru
          _
        %s274 = sand.u32 %s60, 1
        %s275 = scalar_lea.sflag [#allocation8], %s274
        %s276 = sand.u32 %s60, 1
        %s277 = smul.addr %s276, 8
        %s278 = scalar_lea.vmem [#allocation7], %s277
        %p279 = pneg %p73
        %p280 = pneg %p70
        %s281 = sand.u32 %s92, 1
        %s282 = scalar_lea.sflag [#allocation11], %s281
        %s283 = sand.u32 %s92, 1
        %s284 = smul.addr %s283, 1024
        %s285 = scalar_lea.vmem [#allocation10], %s284
        %p286 = pneg %p105
        %p287 = pneg %p102
        %s288 = smul.u32 %s38, 7
        %s289 = sadd.s32 %s288, %s39
        %s290 = sld [smem:[#allocation4 + %s289]]
        %s291 = smul.u32 32, %s290
        %p292 = scmp.lt.s32.totalorder %s291, 255
        %s293 = scalar_select %p292, %s291, 255
        %s294 = smul.addr %s293, 8
        %s295 = scalar_lea.vmem %s5, %s294
        %p296 = pneg %p137
        %p297 = pneg %p134
        %p298 = pneg %p169
        %p299 = pneg %p166
        %s300 = sand.u32 %s156, 1
        %s301 = scalar_lea.sflag [#allocation9], %s300
        %s302 = sand.u32 %s156, 1
        %s303 = smul.addr %s302, 256
        %s304 = scalar_lea.vmem [#allocation12], %s303
        %s305 = smul.u32 %s38, 6
        %s306 = sadd.s32 %s305, %s39
        %s307 = sld [smem:[#allocation5 + %s306]]
        %s308 = smul.u32 8, %s307
        %s309 = smul.u32 %s38, 6
        %s310 = sadd.s32 %s309, %s39
        %s311 = sld [smem:[#allocation5 + %s310]]
        %s312 = smul.u32 128, %s311
        %s313 = smul.u32 %s38, 7
        %s314 = sadd.s32 %s313, %s39
        %s315 = sld [smem:[#allocation4 + %s314]]
        %s316 = smul.u32 32, %s315
        %p317 = scmp.lt.s32.totalorder %s316, 255
        %s318 = scalar_select %p317, %s316, 255
        %s319 = smul.addr %s318, 8
        %s320 = scalar_lea.vmem %s5, %s319
        %s321 = smul.u32 %s38, 7
        %s322 = sadd.s32 %s321, %s39
        %s323 = sld [smem:[#allocation4 + %s322]]
        %s324 = smul.u32 32, %s323
        %s325 = smul.u32 %s38, 7
        %s326 = sadd.s32 %s325, %s39
        %s327 = sld [smem:[#allocation4 + %s326]]
        %s328 = smul.u32 32, %s327
        %s329 = smul.u32 %s38, 7
        %s330 = smul.u32 %s38, 6
        %s331 = sadd.s32 %s329, %s39
        %s332 = sld [smem:[#allocation4 + %s331]]
        %p333 = scmp.eq.s32.totalorder %s39, 0
        %s334 = ssub.s32 %s39, 1
        %p335 = scmp.gt.s32.totalorder %s334, 0
        %s336 = scalar_select %p335, %s334, 0
        %s337 = sadd.s32 %s329, %s336
        %s338 = sld [smem:[#allocation4 + %s337]]
        %p339 = scmp.ne.s32.totalorder %s332, %s338
        %p340 = por %p333, %p339
        // Predicated region
        $region41: #{tpu_custom_call.1} parent=31 // pred_check
          %p341 = pneg %p340
        $region42: #{tpu_custom_call.1} parent=31 // pred_check_branch
          %343 = sbr.rel (%p341) target = $region44
        $region43: #{tpu_custom_call.1} parent=31 // pred_region
          %344 = vst [vmem:[#allocation2] sm:$0xff] 0.0
          %345 = vst [vmem:[#allocation2 + $0x8] sm:$0xff] 0.0
          %346 = vst [vmem:[#allocation2 + $0x10] sm:$0xff] 0.0
          %347 = vst [vmem:[#allocation2 + $0x18] sm:$0xff] 0.0
          %348 = vst [vmem:[#allocation2 + $0x20] sm:$0xff] 0.0
          %349 = vst [vmem:[#allocation2 + $0x28] sm:$0xff] 0.0
          %350 = vst [vmem:[#allocation2 + $0x30] sm:$0xff] 0.0
          %351 = vst [vmem:[#allocation2 + $0x38] sm:$0xff] 0.0
          %352 = vst [vmem:[#allocation2 + $0x40] sm:$0xff] 0.0
          %353 = vst [vmem:[#allocation2 + $0x48] sm:$0xff] 0.0
          %354 = vst [vmem:[#allocation2 + $0x50] sm:$0xff] 0.0
          %355 = vst [vmem:[#allocation2 + $0x58] sm:$0xff] 0.0
          %356 = vst [vmem:[#allocation2 + $0x60] sm:$0xff] 0.0
          %357 = vst [vmem:[#allocation2 + $0x68] sm:$0xff] 0.0
          %358 = vst [vmem:[#allocation2 + $0x70] sm:$0xff] 0.0
          %359 = vst [vmem:[#allocation2 + $0x78] sm:$0xff] 0.0
          %360 = vst [vmem:[#allocation2 + $0x80] sm:$0xff] 0.0
          %361 = vst [vmem:[#allocation2 + $0x88] sm:$0xff] 0.0
          %362 = vst [vmem:[#allocation2 + $0x90] sm:$0xff] 0.0
          %363 = vst [vmem:[#allocation2 + $0x98] sm:$0xff] 0.0
          %364 = vst [vmem:[#allocation2 + $0xa0] sm:$0xff] 0.0
          %365 = vst [vmem:[#allocation2 + $0xa8] sm:$0xff] 0.0
          %366 = vst [vmem:[#allocation2 + $0xb0] sm:$0xff] 0.0
          %367 = vst [vmem:[#allocation2 + $0xb8] sm:$0xff] 0.0
          %368 = vst [vmem:[#allocation2 + $0xc0] sm:$0xff] 0.0
          %369 = vst [vmem:[#allocation2 + $0xc8] sm:$0xff] 0.0
          %370 = vst [vmem:[#allocation2 + $0xd0] sm:$0xff] 0.0
          %371 = vst [vmem:[#allocation2 + $0xd8] sm:$0xff] 0.0
          %372 = vst [vmem:[#allocation2 + $0xe0] sm:$0xff] 0.0
          %373 = vst [vmem:[#allocation2 + $0xe8] sm:$0xff] 0.0
          %374 = vst [vmem:[#allocation2 + $0xf0] sm:$0xff] 0.0
          %375 = vst [vmem:[#allocation2 + $0xf8] sm:$0xff] 0.0
        $region44: #{tpu_custom_call.1} parent=31 // pred_fallthru
          _
        %s376 = sadd.s32 %s330, %s39
        %s377 = sld [smem:[#allocation6 + %s376]]
        %p378 = scmp.ne.s32.totalorder %s377, 0
        // Predicated region
        $region45: #{tpu_custom_call.1} parent=31 // pred_check
          %p379 = pneg %p378
        $region46: #{tpu_custom_call.1} parent=31 // pred_check_branch
          %381 = sbr.rel (%p379) target = $region48
        $region47: #{tpu_custom_call.1} parent=31 // pred_region
          %v382 = vld [vmem:[%s260] sm:$0xff]
          %s383 = smul.u32 %s332, 256
          %v384 = vstv %s383
          %v385 = vsub.s32 %v382, %v384
          %v386 = vlaneseq
          %v387 = vshrl.u32 %v386, 7
          %v388 = vadd.s32 %v387, 8
          %v389 = vadd.s32 %v387, 16
          %v390 = vadd.s32 %v387, 24
          %v391 = vadd.s32 %v387, 32
          %v392 = vadd.s32 %v387, 40
          %v393 = vadd.s32 %v387, 48
          %v394 = vadd.s32 %v387, 56
          %v395 = vadd.s32 %v387, 64
          %v396 = vadd.s32 %v387, 72
          %v397 = vadd.s32 %v387, 80
          %v398 = vadd.s32 %v387, 88
          %v399 = vadd.s32 %v387, 96
          %v400 = vadd.s32 %v387, 104
          %v401 = vadd.s32 %v387, 112
          %v402 = vadd.s32 %v387, 120
          %v403 = vadd.s32 %v387, 128
          %v404 = vadd.s32 %v387, 136
          %v405 = vadd.s32 %v387, 144
          %v406 = vadd.s32 %v387, 152
          %v407 = vadd.s32 %v387, 160
          %v408 = vadd.s32 %v387, 168
          %v409 = vadd.s32 %v387, 176
          %v410 = vadd.s32 %v387, 184
          %v411 = vadd.s32 %v387, 192
          %v412 = vadd.s32 %v387, 200
          %v413 = vadd.s32 %v387, 208
          %v414 = vadd.s32 %v387, 216
          %v415 = vadd.s32 %v387, 224
          %v416 = vadd.s32 %v387, 232
          %v417 = vadd.s32 %v387, 240
          %v418 = vadd.s32 %v387, 248
          %v419 = vlaneseq
          %v420 = vshrl.u32 %v419, 7
          %v421 = vsub.s32 0, %v420
          %v422 = vrot.slane %v385, %v421
          %v423 = vlaneseq
          %v424 = vshrl.u32 %v423, 7
          %v425 = vsub.s32 1, %v424
          %v426 = vrot.slane %v385, %v425
          %v427 = vlaneseq
          %v428 = vshrl.u32 %v427, 7
          %v429 = vsub.s32 2, %v428
          %v430 = vrot.slane %v385, %v429
          %v431 = vlaneseq
          %v432 = vshrl.u32 %v431, 7
          %v433 = vsub.s32 3, %v432
          %v434 = vrot.slane %v385, %v433
          %v435 = vlaneseq
          %v436 = vshrl.u32 %v435, 7
          %v437 = vsub.s32 4, %v436
          %v438 = vrot.slane %v385, %v437
          %v439 = vlaneseq
          %v440 = vshrl.u32 %v439, 7
          %v441 = vsub.s32 5, %v440
          %v442 = vrot.slane %v385, %v441
          %v443 = vlaneseq
          %v444 = vshrl.u32 %v443, 7
          %v445 = vsub.s32 6, %v444
          %v446 = vrot.slane %v385, %v445
          %v447 = vlaneseq
          %v448 = vshrl.u32 %v447, 7
          %v449 = vsub.s32 7, %v448
          %v450 = vrot.slane %v385, %v449
          %vm451 = vcmp.eq.s32.totalorder %v387, %v422
          %vm452 = vcmp.eq.s32.totalorder %v387, %v426
          %vm453 = vcmp.eq.s32.totalorder %v387, %v430
          %vm454 = vcmp.eq.s32.totalorder %v387, %v434
          %vm455 = vcmp.eq.s32.totalorder %v387, %v438
          %vm456 = vcmp.eq.s32.totalorder %v387, %v442
          %vm457 = vcmp.eq.s32.totalorder %v387, %v446
          %vm458 = vcmp.eq.s32.totalorder %v387, %v450
          %vm459 = vcmp.eq.s32.totalorder %v388, %v422
          %vm460 = vcmp.eq.s32.totalorder %v388, %v426
          %vm461 = vcmp.eq.s32.totalorder %v388, %v430
          %vm462 = vcmp.eq.s32.totalorder %v388, %v434
          %vm463 = vcmp.eq.s32.totalorder %v388, %v438
          %vm464 = vcmp.eq.s32.totalorder %v388, %v442
          %vm465 = vcmp.eq.s32.totalorder %v388, %v446
          %vm466 = vcmp.eq.s32.totalorder %v388, %v450
          %vm467 = vcmp.eq.s32.totalorder %v389, %v422
          %vm468 = vcmp.eq.s32.totalorder %v389, %v426
          %vm469 = vcmp.eq.s32.totalorder %v389, %v430
          %vm470 = vcmp.eq.s32.totalorder %v389, %v434
          %vm471 = vcmp.eq.s32.totalorder %v389, %v438
          %vm472 = vcmp.eq.s32.totalorder %v389, %v442
          %vm473 = vcmp.eq.s32.totalorder %v389, %v446
          %vm474 = vcmp.eq.s32.totalorder %v389, %v450
          %vm475 = vcmp.eq.s32.totalorder %v390, %v422
          %vm476 = vcmp.eq.s32.totalorder %v390, %v426
          %vm477 = vcmp.eq.s32.totalorder %v390, %v430
          %vm478 = vcmp.eq.s32.totalorder %v390, %v434
          %vm479 = vcmp.eq.s32.totalorder %v390, %v438
          %vm480 = vcmp.eq.s32.totalorder %v390, %v442
          %vm481 = vcmp.eq.s32.totalorder %v390, %v446
          %vm482 = vcmp.eq.s32.totalorder %v390, %v450
          %vm483 = vcmp.eq.s32.totalorder %v391, %v422
          %vm484 = vcmp.eq.s32.totalorder %v391, %v426
          %vm485 = vcmp.eq.s32.totalorder %v391, %v430
          %vm486 = vcmp.eq.s32.totalorder %v391, %v434
          %vm487 = vcmp.eq.s32.totalorder %v391, %v438
          %vm488 = vcmp.eq.s32.totalorder %v391, %v442
          %vm489 = vcmp.eq.s32.totalorder %v391, %v446
          %vm490 = vcmp.eq.s32.totalorder %v391, %v450
          %vm491 = vcmp.eq.s32.totalorder %v392, %v422
          %vm492 = vcmp.eq.s32.totalorder %v392, %v426
          %vm493 = vcmp.eq.s32.totalorder %v392, %v430
          %vm494 = vcmp.eq.s32.totalorder %v392, %v434
          %vm495 = vcmp.eq.s32.totalorder %v392, %v438
          %vm496 = vcmp.eq.s32.totalorder %v392, %v442
          %vm497 = vcmp.eq.s32.totalorder %v392, %v446
          %vm498 = vcmp.eq.s32.totalorder %v392, %v450
          %vm499 = vcmp.eq.s32.totalorder %v393, %v422
          %vm500 = vcmp.eq.s32.totalorder %v393, %v426
          %vm501 = vcmp.eq.s32.totalorder %v393, %v430
          %vm502 = vcmp.eq.s32.totalorder %v393, %v434
          %vm503 = vcmp.eq.s32.totalorder %v393, %v438
          %vm504 = vcmp.eq.s32.totalorder %v393, %v442
          %vm505 = vcmp.eq.s32.totalorder %v393, %v446
          %vm506 = vcmp.eq.s32.totalorder %v393, %v450
          %vm507 = vcmp.eq.s32.totalorder %v394, %v422
          %vm508 = vcmp.eq.s32.totalorder %v394, %v426
          %vm509 = vcmp.eq.s32.totalorder %v394, %v430
          %vm510 = vcmp.eq.s32.totalorder %v394, %v434
          %vm511 = vcmp.eq.s32.totalorder %v394, %v438
          %vm512 = vcmp.eq.s32.totalorder %v394, %v442
          %vm513 = vcmp.eq.s32.totalorder %v394, %v446
          %vm514 = vcmp.eq.s32.totalorder %v394, %v450
          %vm515 = vcmp.eq.s32.totalorder %v395, %v422
          %vm516 = vcmp.eq.s32.totalorder %v395, %v426
          %vm517 = vcmp.eq.s32.totalorder %v395, %v430
          %vm518 = vcmp.eq.s32.totalorder %v395, %v434
          %vm519 = vcmp.eq.s32.totalorder %v395, %v438
          %vm520 = vcmp.eq.s32.totalorder %v395, %v442
          %vm521 = vcmp.eq.s32.totalorder %v395, %v446
          %vm522 = vcmp.eq.s32.totalorder %v395, %v450
          %vm523 = vcmp.eq.s32.totalorder %v396, %v422
          %vm524 = vcmp.eq.s32.totalorder %v396, %v426
          %vm525 = vcmp.eq.s32.totalorder %v396, %v430
          %vm526 = vcmp.eq.s32.totalorder %v396, %v434
          %vm527 = vcmp.eq.s32.totalorder %v396, %v438
          %vm528 = vcmp.eq.s32.totalorder %v396, %v442
          %vm529 = vcmp.eq.s32.totalorder %v396, %v446
          %vm530 = vcmp.eq.s32.totalorder %v396, %v450
          %vm531 = vcmp.eq.s32.totalorder %v397, %v422
          %vm532 = vcmp.eq.s32.totalorder %v397, %v426
          %vm533 = vcmp.eq.s32.totalorder %v397, %v430
          %vm534 = vcmp.eq.s32.totalorder %v397, %v434
          %vm535 = vcmp.eq.s32.totalorder %v397, %v438
          %vm536 = vcmp.eq.s32.totalorder %v397, %v442
          %vm537 = vcmp.eq.s32.totalorder %v397, %v446
          %vm538 = vcmp.eq.s32.totalorder %v397, %v450
          %vm539 = vcmp.eq.s32.totalorder %v398, %v422
          %vm540 = vcmp.eq.s32.totalorder %v398, %v426
          %vm541 = vcmp.eq.s32.totalorder %v398, %v430
          %vm542 = vcmp.eq.s32.totalorder %v398, %v434
          %vm543 = vcmp.eq.s32.totalorder %v398, %v438
          %vm544 = vcmp.eq.s32.totalorder %v398, %v442
          %vm545 = vcmp.eq.s32.totalorder %v398, %v446
          %vm546 = vcmp.eq.s32.totalorder %v398, %v450
          %vm547 = vcmp.eq.s32.totalorder %v399, %v422
          %vm548 = vcmp.eq.s32.totalorder %v399, %v426
          %vm549 = vcmp.eq.s32.totalorder %v399, %v430
          %vm550 = vcmp.eq.s32.totalorder %v399, %v434
          %vm551 = vcmp.eq.s32.totalorder %v399, %v438
          %vm552 = vcmp.eq.s32.totalorder %v399, %v442
          %vm553 = vcmp.eq.s32.totalorder %v399, %v446
          %vm554 = vcmp.eq.s32.totalorder %v399, %v450
          %vm555 = vcmp.eq.s32.totalorder %v400, %v422
          %vm556 = vcmp.eq.s32.totalorder %v400, %v426
          %vm557 = vcmp.eq.s32.totalorder %v400, %v430
          %vm558 = vcmp.eq.s32.totalorder %v400, %v434
          %vm559 = vcmp.eq.s32.totalorder %v400, %v438
          %vm560 = vcmp.eq.s32.totalorder %v400, %v442
          %vm561 = vcmp.eq.s32.totalorder %v400, %v446
          %vm562 = vcmp.eq.s32.totalorder %v400, %v450
          %vm563 = vcmp.eq.s32.totalorder %v401, %v422
          %vm564 = vcmp.eq.s32.totalorder %v401, %v426
          %vm565 = vcmp.eq.s32.totalorder %v401, %v430
          %vm566 = vcmp.eq.s32.totalorder %v401, %v434
          %vm567 = vcmp.eq.s32.totalorder %v401, %v438
          %vm568 = vcmp.eq.s32.totalorder %v401, %v442
          %vm569 = vcmp.eq.s32.totalorder %v401, %v446
          %vm570 = vcmp.eq.s32.totalorder %v401, %v450
          %vm571 = vcmp.eq.s32.totalorder %v402, %v422
          %vm572 = vcmp.eq.s32.totalorder %v402, %v426
          %vm573 = vcmp.eq.s32.totalorder %v402, %v430
          %vm574 = vcmp.eq.s32.totalorder %v402, %v434
          %vm575 = vcmp.eq.s32.totalorder %v402, %v438
          %vm576 = vcmp.eq.s32.totalorder %v402, %v442
          %vm577 = vcmp.eq.s32.totalorder %v402, %v446
          %vm578 = vcmp.eq.s32.totalorder %v402, %v450
          %vm579 = vcmp.eq.s32.totalorder %v403, %v422
          %vm580 = vcmp.eq.s32.totalorder %v403, %v426
          %vm581 = vcmp.eq.s32.totalorder %v403, %v430
          %vm582 = vcmp.eq.s32.totalorder %v403, %v434
          %vm583 = vcmp.eq.s32.totalorder %v403, %v438
          %vm584 = vcmp.eq.s32.totalorder %v403, %v442
          %vm585 = vcmp.eq.s32.totalorder %v403, %v446
          %vm586 = vcmp.eq.s32.totalorder %v403, %v450
          %vm587 = vcmp.eq.s32.totalorder %v404, %v422
          %vm588 = vcmp.eq.s32.totalorder %v404, %v426
          %vm589 = vcmp.eq.s32.totalorder %v404, %v430
          %vm590 = vcmp.eq.s32.totalorder %v404, %v434
          %vm591 = vcmp.eq.s32.totalorder %v404, %v438
          %vm592 = vcmp.eq.s32.totalorder %v404, %v442
          %vm593 = vcmp.eq.s32.totalorder %v404, %v446
          %vm594 = vcmp.eq.s32.totalorder %v404, %v450
          %vm595 = vcmp.eq.s32.totalorder %v405, %v422
          %vm596 = vcmp.eq.s32.totalorder %v405, %v426
          %vm597 = vcmp.eq.s32.totalorder %v405, %v430
          %vm598 = vcmp.eq.s32.totalorder %v405, %v434
          %vm599 = vcmp.eq.s32.totalorder %v405, %v438
          %vm600 = vcmp.eq.s32.totalorder %v405, %v442
          %vm601 = vcmp.eq.s32.totalorder %v405, %v446
          %vm602 = vcmp.eq.s32.totalorder %v405, %v450
          %vm603 = vcmp.eq.s32.totalorder %v406, %v422
          %vm604 = vcmp.eq.s32.totalorder %v406, %v426
          %vm605 = vcmp.eq.s32.totalorder %v406, %v430
          %vm606 = vcmp.eq.s32.totalorder %v406, %v434
          %vm607 = vcmp.eq.s32.totalorder %v406, %v438
          %vm608 = vcmp.eq.s32.totalorder %v406, %v442
          %vm609 = vcmp.eq.s32.totalorder %v406, %v446
          %vm610 = vcmp.eq.s32.totalorder %v406, %v450
          %vm611 = vcmp.eq.s32.totalorder %v407, %v422
          %vm612 = vcmp.eq.s32.totalorder %v407, %v426
          %vm613 = vcmp.eq.s32.totalorder %v407, %v430
          %vm614 = vcmp.eq.s32.totalorder %v407, %v434
          %vm615 = vcmp.eq.s32.totalorder %v407, %v438
          %vm616 = vcmp.eq.s32.totalorder %v407, %v442
          %vm617 = vcmp.eq.s32.totalorder %v407, %v446
          %vm618 = vcmp.eq.s32.totalorder %v407, %v450
          %vm619 = vcmp.eq.s32.totalorder %v408, %v422
          %vm620 = vcmp.eq.s32.totalorder %v408, %v426
          %vm621 = vcmp.eq.s32.totalorder %v408, %v430
          %vm622 = vcmp.eq.s32.totalorder %v408, %v434
          %vm623 = vcmp.eq.s32.totalorder %v408, %v438
          %vm624 = vcmp.eq.s32.totalorder %v408, %v442
          %vm625 = vcmp.eq.s32.totalorder %v408, %v446
          %vm626 = vcmp.eq.s32.totalorder %v408, %v450
          %vm627 = vcmp.eq.s32.totalorder %v409, %v422
          %vm628 = vcmp.eq.s32.totalorder %v409, %v426
          %vm629 = vcmp.eq.s32.totalorder %v409, %v430
          %vm630 = vcmp.eq.s32.totalorder %v409, %v434
          %vm631 = vcmp.eq.s32.totalorder %v409, %v438
          %vm632 = vcmp.eq.s32.totalorder %v409, %v442
          %vm633 = vcmp.eq.s32.totalorder %v409, %v446
          %vm634 = vcmp.eq.s32.totalorder %v409, %v450
          %vm635 = vcmp.eq.s32.totalorder %v410, %v422
          %vm636 = vcmp.eq.s32.totalorder %v410, %v426
          %vm637 = vcmp.eq.s32.totalorder %v410, %v430
          %vm638 = vcmp.eq.s32.totalorder %v410, %v434
          %vm639 = vcmp.eq.s32.totalorder %v410, %v438
          %vm640 = vcmp.eq.s32.totalorder %v410, %v442
          %vm641 = vcmp.eq.s32.totalorder %v410, %v446
          %vm642 = vcmp.eq.s32.totalorder %v410, %v450
          %vm643 = vcmp.eq.s32.totalorder %v411, %v422
          %vm644 = vcmp.eq.s32.totalorder %v411, %v426
          %vm645 = vcmp.eq.s32.totalorder %v411, %v430
          %vm646 = vcmp.eq.s32.totalorder %v411, %v434
          %vm647 = vcmp.eq.s32.totalorder %v411, %v438
          %vm648 = vcmp.eq.s32.totalorder %v411, %v442
          %vm649 = vcmp.eq.s32.totalorder %v411, %v446
          %vm650 = vcmp.eq.s32.totalorder %v411, %v450
          %vm651 = vcmp.eq.s32.totalorder %v412, %v422
          %vm652 = vcmp.eq.s32.totalorder %v412, %v426
          %vm653 = vcmp.eq.s32.totalorder %v412, %v430
          %vm654 = vcmp.eq.s32.totalorder %v412, %v434
          %vm655 = vcmp.eq.s32.totalorder %v412, %v438
          %vm656 = vcmp.eq.s32.totalorder %v412, %v442
          %vm657 = vcmp.eq.s32.totalorder %v412, %v446
          %vm658 = vcmp.eq.s32.totalorder %v412, %v450
          %vm659 = vcmp.eq.s32.totalorder %v413, %v422
          %vm660 = vcmp.eq.s32.totalorder %v413, %v426
          %vm661 = vcmp.eq.s32.totalorder %v413, %v430
          %vm662 = vcmp.eq.s32.totalorder %v413, %v434
          %vm663 = vcmp.eq.s32.totalorder %v413, %v438
          %vm664 = vcmp.eq.s32.totalorder %v413, %v442
          %vm665 = vcmp.eq.s32.totalorder %v413, %v446
          %vm666 = vcmp.eq.s32.totalorder %v413, %v450
          %vm667 = vcmp.eq.s32.totalorder %v414, %v422
          %vm668 = vcmp.eq.s32.totalorder %v414, %v426
          %vm669 = vcmp.eq.s32.totalorder %v414, %v430
          %vm670 = vcmp.eq.s32.totalorder %v414, %v434
          %vm671 = vcmp.eq.s32.totalorder %v414, %v438
          %vm672 = vcmp.eq.s32.totalorder %v414, %v442
          %vm673 = vcmp.eq.s32.totalorder %v414, %v446
          %vm674 = vcmp.eq.s32.totalorder %v414, %v450
          %vm675 = vcmp.eq.s32.totalorder %v415, %v422
          %vm676 = vcmp.eq.s32.totalorder %v415, %v426
          %vm677 = vcmp.eq.s32.totalorder %v415, %v430
          %vm678 = vcmp.eq.s32.totalorder %v415, %v434
          %vm679 = vcmp.eq.s32.totalorder %v415, %v438
          %vm680 = vcmp.eq.s32.totalorder %v415, %v442
          %vm681 = vcmp.eq.s32.totalorder %v415, %v446
          %vm682 = vcmp.eq.s32.totalorder %v415, %v450
          %vm683 = vcmp.eq.s32.totalorder %v416, %v422
          %vm684 = vcmp.eq.s32.totalorder %v416, %v426
          %vm685 = vcmp.eq.s32.totalorder %v416, %v430
          %vm686 = vcmp.eq.s32.totalorder %v416, %v434
          %vm687 = vcmp.eq.s32.totalorder %v416, %v438
          %vm688 = vcmp.eq.s32.totalorder %v416, %v442
          %vm689 = vcmp.eq.s32.totalorder %v416, %v446
          %vm690 = vcmp.eq.s32.totalorder %v416, %v450
          %vm691 = vcmp.eq.s32.totalorder %v417, %v422
          %vm692 = vcmp.eq.s32.totalorder %v417, %v426
          %vm693 = vcmp.eq.s32.totalorder %v417, %v430
          %vm694 = vcmp.eq.s32.totalorder %v417, %v434
          %vm695 = vcmp.eq.s32.totalorder %v417, %v438
          %vm696 = vcmp.eq.s32.totalorder %v417, %v442
          %vm697 = vcmp.eq.s32.totalorder %v417, %v446
          %vm698 = vcmp.eq.s32.totalorder %v417, %v450
          %vm699 = vcmp.eq.s32.totalorder %v418, %v422
          %vm700 = vcmp.eq.s32.totalorder %v418, %v426
          %vm701 = vcmp.eq.s32.totalorder %v418, %v430
          %vm702 = vcmp.eq.s32.totalorder %v418, %v434
          %vm703 = vcmp.eq.s32.totalorder %v418, %v438
          %vm704 = vcmp.eq.s32.totalorder %v418, %v442
          %vm705 = vcmp.eq.s32.totalorder %v418, %v446
          %vm706 = vcmp.eq.s32.totalorder %v418, %v450
          %v707 = vsel %vm451, 1, 0
          %v708 = vsel %vm452, 1, 0
          %v709 = vsel %vm453, 1, 0
          %v710 = vsel %vm454, 1, 0
          %v711 = vsel %vm455, 1, 0
          %v712 = vsel %vm456, 1, 0
          %v713 = vsel %vm457, 1, 0
          %v714 = vsel %vm458, 1, 0
          %v715 = vsel %vm459, 1, 0
          %v716 = vsel %vm460, 1, 0
          %v717 = vsel %vm461, 1, 0
          %v718 = vsel %vm462, 1, 0
          %v719 = vsel %vm463, 1, 0
          %v720 = vsel %vm464, 1, 0
          %v721 = vsel %vm465, 1, 0
          %v722 = vsel %vm466, 1, 0
          %v723 = vsel %vm467, 1, 0
          %v724 = vsel %vm468, 1, 0
          %v725 = vsel %vm469, 1, 0
          %v726 = vsel %vm470, 1, 0
          %v727 = vsel %vm471, 1, 0
          %v728 = vsel %vm472, 1, 0
          %v729 = vsel %vm473, 1, 0
          %v730 = vsel %vm474, 1, 0
          %v731 = vsel %vm475, 1, 0
          %v732 = vsel %vm476, 1, 0
          %v733 = vsel %vm477, 1, 0
          %v734 = vsel %vm478, 1, 0
          %v735 = vsel %vm479, 1, 0
          %v736 = vsel %vm480, 1, 0
          %v737 = vsel %vm481, 1, 0
          %v738 = vsel %vm482, 1, 0
          %v739 = vsel %vm483, 1, 0
          %v740 = vsel %vm484, 1, 0
          %v741 = vsel %vm485, 1, 0
          %v742 = vsel %vm486, 1, 0
          %v743 = vsel %vm487, 1, 0
          %v744 = vsel %vm488, 1, 0
          %v745 = vsel %vm489, 1, 0
          %v746 = vsel %vm490, 1, 0
          %v747 = vsel %vm491, 1, 0
          %v748 = vsel %vm492, 1, 0
          %v749 = vsel %vm493, 1, 0
          %v750 = vsel %vm494, 1, 0
          %v751 = vsel %vm495, 1, 0
          %v752 = vsel %vm496, 1, 0
          %v753 = vsel %vm497, 1, 0
          %v754 = vsel %vm498, 1, 0
          %v755 = vsel %vm499, 1, 0
          %v756 = vsel %vm500, 1, 0
          %v757 = vsel %vm501, 1, 0
          %v758 = vsel %vm502, 1, 0
          %v759 = vsel %vm503, 1, 0
          %v760 = vsel %vm504, 1, 0
          %v761 = vsel %vm505, 1, 0
          %v762 = vsel %vm506, 1, 0
          %v763 = vsel %vm507, 1, 0
          %v764 = vsel %vm508, 1, 0
          %v765 = vsel %vm509, 1, 0
          %v766 = vsel %vm510, 1, 0
          %v767 = vsel %vm511, 1, 0
          %v768 = vsel %vm512, 1, 0
          %v769 = vsel %vm513, 1, 0
          %v770 = vsel %vm514, 1, 0
          %v771 = vsel %vm515, 1, 0
          %v772 = vsel %vm516, 1, 0
          %v773 = vsel %vm517, 1, 0
          %v774 = vsel %vm518, 1, 0
          %v775 = vsel %vm519, 1, 0
          %v776 = vsel %vm520, 1, 0
          %v777 = vsel %vm521, 1, 0
          %v778 = vsel %vm522, 1, 0
          %v779 = vsel %vm523, 1, 0
          %v780 = vsel %vm524, 1, 0
          %v781 = vsel %vm525, 1, 0
          %v782 = vsel %vm526, 1, 0
          %v783 = vsel %vm527, 1, 0
          %v784 = vsel %vm528, 1, 0
          %v785 = vsel %vm529, 1, 0
          %v786 = vsel %vm530, 1, 0
          %v787 = vsel %vm531, 1, 0
          %v788 = vsel %vm532, 1, 0
          %v789 = vsel %vm533, 1, 0
          %v790 = vsel %vm534, 1, 0
          %v791 = vsel %vm535, 1, 0
          %v792 = vsel %vm536, 1, 0
          %v793 = vsel %vm537, 1, 0
          %v794 = vsel %vm538, 1, 0
          %v795 = vsel %vm539, 1, 0
          %v796 = vsel %vm540, 1, 0
          %v797 = vsel %vm541, 1, 0
          %v798 = vsel %vm542, 1, 0
          %v799 = vsel %vm543, 1, 0
          %v800 = vsel %vm544, 1, 0
          %v801 = vsel %vm545, 1, 0
          %v802 = vsel %vm546, 1, 0
          %v803 = vsel %vm547, 1, 0
          %v804 = vsel %vm548, 1, 0
          %v805 = vsel %vm549, 1, 0
          %v806 = vsel %vm550, 1, 0
          %v807 = vsel %vm551, 1, 0
          %v808 = vsel %vm552, 1, 0
          %v809 = vsel %vm553, 1, 0
          %v810 = vsel %vm554, 1, 0
          %v811 = vsel %vm555, 1, 0
          %v812 = vsel %vm556, 1, 0
          %v813 = vsel %vm557, 1, 0
          %v814 = vsel %vm558, 1, 0
          %v815 = vsel %vm559, 1, 0
          %v816 = vsel %vm560, 1, 0
          %v817 = vsel %vm561, 1, 0
          %v818 = vsel %vm562, 1, 0
          %v819 = vsel %vm563, 1, 0
          %v820 = vsel %vm564, 1, 0
          %v821 = vsel %vm565, 1, 0
          %v822 = vsel %vm566, 1, 0
          %v823 = vsel %vm567, 1, 0
          %v824 = vsel %vm568, 1, 0
          %v825 = vsel %vm569, 1, 0
          %v826 = vsel %vm570, 1, 0
          %v827 = vsel %vm571, 1, 0
          %v828 = vsel %vm572, 1, 0
          %v829 = vsel %vm573, 1, 0
          %v830 = vsel %vm574, 1, 0
          %v831 = vsel %vm575, 1, 0
          %v832 = vsel %vm576, 1, 0
          %v833 = vsel %vm577, 1, 0
          %v834 = vsel %vm578, 1, 0
          %v835 = vsel %vm579, 1, 0
          %v836 = vsel %vm580, 1, 0
          %v837 = vsel %vm581, 1, 0
          %v838 = vsel %vm582, 1, 0
          %v839 = vsel %vm583, 1, 0
          %v840 = vsel %vm584, 1, 0
          %v841 = vsel %vm585, 1, 0
          %v842 = vsel %vm586, 1, 0
          %v843 = vsel %vm587, 1, 0
          %v844 = vsel %vm588, 1, 0
          %v845 = vsel %vm589, 1, 0
          %v846 = vsel %vm590, 1, 0
          %v847 = vsel %vm591, 1, 0
          %v848 = vsel %vm592, 1, 0
          %v849 = vsel %vm593, 1, 0
          %v850 = vsel %vm594, 1, 0
          %v851 = vsel %vm595, 1, 0
          %v852 = vsel %vm596, 1, 0
          %v853 = vsel %vm597, 1, 0
          %v854 = vsel %vm598, 1, 0
          %v855 = vsel %vm599, 1, 0
          %v856 = vsel %vm600, 1, 0
          %v857 = vsel %vm601, 1, 0
          %v858 = vsel %vm602, 1, 0
          %v859 = vsel %vm603, 1, 0
          %v860 = vsel %vm604, 1, 0
          %v861 = vsel %vm605, 1, 0
          %v862 = vsel %vm606, 1, 0
          %v863 = vsel %vm607, 1, 0
          %v864 = vsel %vm608, 1, 0
          %v865 = vsel %vm609, 1, 0
          %v866 = vsel %vm610, 1, 0
          %v867 = vsel %vm611, 1, 0
          %v868 = vsel %vm612, 1, 0
          %v869 = vsel %vm613, 1, 0
          %v870 = vsel %vm614, 1, 0
          %v871 = vsel %vm615, 1, 0
          %v872 = vsel %vm616, 1, 0
          %v873 = vsel %vm617, 1, 0
          %v874 = vsel %vm618, 1, 0
          %v875 = vsel %vm619, 1, 0
          %v876 = vsel %vm620, 1, 0
          %v877 = vsel %vm621, 1, 0
          %v878 = vsel %vm622, 1, 0
          %v879 = vsel %vm623, 1, 0
          %v880 = vsel %vm624, 1, 0
          %v881 = vsel %vm625, 1, 0
          %v882 = vsel %vm626, 1, 0
          %v883 = vsel %vm627, 1, 0
          %v884 = vsel %vm628, 1, 0
          %v885 = vsel %vm629, 1, 0
          %v886 = vsel %vm630, 1, 0
          %v887 = vsel %vm631, 1, 0
          %v888 = vsel %vm632, 1, 0
          %v889 = vsel %vm633, 1, 0
          %v890 = vsel %vm634, 1, 0
          %v891 = vsel %vm635, 1, 0
          %v892 = vsel %vm636, 1, 0
          %v893 = vsel %vm637, 1, 0
          %v894 = vsel %vm638, 1, 0
          %v895 = vsel %vm639, 1, 0
          %v896 = vsel %vm640, 1, 0
          %v897 = vsel %vm641, 1, 0
          %v898 = vsel %vm642, 1, 0
          %v899 = vsel %vm643, 1, 0
          %v900 = vsel %vm644, 1, 0
          %v901 = vsel %vm645, 1, 0
          %v902 = vsel %vm646, 1, 0
          %v903 = vsel %vm647, 1, 0
          %v904 = vsel %vm648, 1, 0
          %v905 = vsel %vm649, 1, 0
          %v906 = vsel %vm650, 1, 0
          %v907 = vsel %vm651, 1, 0
          %v908 = vsel %vm652, 1, 0
          %v909 = vsel %vm653, 1, 0
          %v910 = vsel %vm654, 1, 0
          %v911 = vsel %vm655, 1, 0
          %v912 = vsel %vm656, 1, 0
          %v913 = vsel %vm657, 1, 0
          %v914 = vsel %vm658, 1, 0
          %v915 = vsel %vm659, 1, 0
          %v916 = vsel %vm660, 1, 0
          %v917 = vsel %vm661, 1, 0
          %v918 = vsel %vm662, 1, 0
          %v919 = vsel %vm663, 1, 0
          %v920 = vsel %vm664, 1, 0
          %v921 = vsel %vm665, 1, 0
          %v922 = vsel %vm666, 1, 0
          %v923 = vsel %vm667, 1, 0
          %v924 = vsel %vm668, 1, 0
          %v925 = vsel %vm669, 1, 0
          %v926 = vsel %vm670, 1, 0
          %v927 = vsel %vm671, 1, 0
          %v928 = vsel %vm672, 1, 0
          %v929 = vsel %vm673, 1, 0
          %v930 = vsel %vm674, 1, 0
          %v931 = vsel %vm675, 1, 0
          %v932 = vsel %vm676, 1, 0
          %v933 = vsel %vm677, 1, 0
          %v934 = vsel %vm678, 1, 0
          %v935 = vsel %vm679, 1, 0
          %v936 = vsel %vm680, 1, 0
          %v937 = vsel %vm681, 1, 0
          %v938 = vsel %vm682, 1, 0
          %v939 = vsel %vm683, 1, 0
          %v940 = vsel %vm684, 1, 0
          %v941 = vsel %vm685, 1, 0
          %v942 = vsel %vm686, 1, 0
          %v943 = vsel %vm687, 1, 0
          %v944 = vsel %vm688, 1, 0
          %v945 = vsel %vm689, 1, 0
          %v946 = vsel %vm690, 1, 0
          %v947 = vsel %vm691, 1, 0
          %v948 = vsel %vm692, 1, 0
          %v949 = vsel %vm693, 1, 0
          %v950 = vsel %vm694, 1, 0
          %v951 = vsel %vm695, 1, 0
          %v952 = vsel %vm696, 1, 0
          %v953 = vsel %vm697, 1, 0
          %v954 = vsel %vm698, 1, 0
          %v955 = vsel %vm699, 1, 0
          %v956 = vsel %vm700, 1, 0
          %v957 = vsel %vm701, 1, 0
          %v958 = vsel %vm702, 1, 0
          %v959 = vsel %vm703, 1, 0
          %v960 = vsel %vm704, 1, 0
          %v961 = vsel %vm705, 1, 0
          %v962 = vsel %vm706, 1, 0
          %v963 = vcvt.s32.f32 %v707
          %v964 = vcvt.s32.f32 %v708
          %v965 = vcvt.s32.f32 %v709
          %v966 = vcvt.s32.f32 %v710
          %v967 = vcvt.s32.f32 %v711
          %v968 = vcvt.s32.f32 %v712
          %v969 = vcvt.s32.f32 %v713
          %v970 = vcvt.s32.f32 %v714
          %v971 = vcvt.s32.f32 %v715
          %v972 = vcvt.s32.f32 %v716
          %v973 = vcvt.s32.f32 %v717
          %v974 = vcvt.s32.f32 %v718
          %v975 = vcvt.s32.f32 %v719
          %v976 = vcvt.s32.f32 %v720
          %v977 = vcvt.s32.f32 %v721
          %v978 = vcvt.s32.f32 %v722
          %v979 = vcvt.s32.f32 %v723
          %v980 = vcvt.s32.f32 %v724
          %v981 = vcvt.s32.f32 %v725
          %v982 = vcvt.s32.f32 %v726
          %v983 = vcvt.s32.f32 %v727
          %v984 = vcvt.s32.f32 %v728
          %v985 = vcvt.s32.f32 %v729
          %v986 = vcvt.s32.f32 %v730
          %v987 = vcvt.s32.f32 %v731
          %v988 = vcvt.s32.f32 %v732
          %v989 = vcvt.s32.f32 %v733
          %v990 = vcvt.s32.f32 %v734
          %v991 = vcvt.s32.f32 %v735
          %v992 = vcvt.s32.f32 %v736
          %v993 = vcvt.s32.f32 %v737
          %v994 = vcvt.s32.f32 %v738
          %v995 = vcvt.s32.f32 %v739
          %v996 = vcvt.s32.f32 %v740
          %v997 = vcvt.s32.f32 %v741
          %v998 = vcvt.s32.f32 %v742
          %v999 = vcvt.s32.f32 %v743
          %v1000 = vcvt.s32.f32 %v744
          %v1001 = vcvt.s32.f32 %v745
          %v1002 = vcvt.s32.f32 %v746
          %v1003 = vcvt.s32.f32 %v747
          %v1004 = vcvt.s32.f32 %v748
          %v1005 = vcvt.s32.f32 %v749
          %v1006 = vcvt.s32.f32 %v750
          %v1007 = vcvt.s32.f32 %v751
          %v1008 = vcvt.s32.f32 %v752
          %v1009 = vcvt.s32.f32 %v753
          %v1010 = vcvt.s32.f32 %v754
          %v1011 = vcvt.s32.f32 %v755
          %v1012 = vcvt.s32.f32 %v756
          %v1013 = vcvt.s32.f32 %v757
          %v1014 = vcvt.s32.f32 %v758
          %v1015 = vcvt.s32.f32 %v759
          %v1016 = vcvt.s32.f32 %v760
          %v1017 = vcvt.s32.f32 %v761
          %v1018 = vcvt.s32.f32 %v762
          %v1019 = vcvt.s32.f32 %v763
          %v1020 = vcvt.s32.f32 %v764
          %v1021 = vcvt.s32.f32 %v765
          %v1022 = vcvt.s32.f32 %v766
          %v1023 = vcvt.s32.f32 %v767
          %v1024 = vcvt.s32.f32 %v768
          %v1025 = vcvt.s32.f32 %v769
          %v1026 = vcvt.s32.f32 %v770
          %v1027 = vcvt.s32.f32 %v771
          %v1028 = vcvt.s32.f32 %v772
          %v1029 = vcvt.s32.f32 %v773
          %v1030 = vcvt.s32.f32 %v774
          %v1031 = vcvt.s32.f32 %v775
          %v1032 = vcvt.s32.f32 %v776
          %v1033 = vcvt.s32.f32 %v777
          %v1034 = vcvt.s32.f32 %v778
          %v1035 = vcvt.s32.f32 %v779
          %v1036 = vcvt.s32.f32 %v780
          %v1037 = vcvt.s32.f32 %v781
          %v1038 = vcvt.s32.f32 %v782
          %v1039 = vcvt.s32.f32 %v783
          %v1040 = vcvt.s32.f32 %v784
          %v1041 = vcvt.s32.f32 %v785
          %v1042 = vcvt.s32.f32 %v786
          %v1043 = vcvt.s32.f32 %v787
          %v1044 = vcvt.s32.f32 %v788
          %v1045 = vcvt.s32.f32 %v789
          %v1046 = vcvt.s32.f32 %v790
          %v1047 = vcvt.s32.f32 %v791
          %v1048 = vcvt.s32.f32 %v792
          %v1049 = vcvt.s32.f32 %v793
          %v1050 = vcvt.s32.f32 %v794
          %v1051 = vcvt.s32.f32 %v795
          %v1052 = vcvt.s32.f32 %v796
          %v1053 = vcvt.s32.f32 %v797
          %v1054 = vcvt.s32.f32 %v798
          %v1055 = vcvt.s32.f32 %v799
          %v1056 = vcvt.s32.f32 %v800
          %v1057 = vcvt.s32.f32 %v801
          %v1058 = vcvt.s32.f32 %v802
          %v1059 = vcvt.s32.f32 %v803
          %v1060 = vcvt.s32.f32 %v804
          %v1061 = vcvt.s32.f32 %v805
          %v1062 = vcvt.s32.f32 %v806
          %v1063 = vcvt.s32.f32 %v807
          %v1064 = vcvt.s32.f32 %v808
          %v1065 = vcvt.s32.f32 %v809
          %v1066 = vcvt.s32.f32 %v810
          %v1067 = vcvt.s32.f32 %v811
          %v1068 = vcvt.s32.f32 %v812
          %v1069 = vcvt.s32.f32 %v813
          %v1070 = vcvt.s32.f32 %v814
          %v1071 = vcvt.s32.f32 %v815
          %v1072 = vcvt.s32.f32 %v816
          %v1073 = vcvt.s32.f32 %v817
          %v1074 = vcvt.s32.f32 %v818
          %v1075 = vcvt.s32.f32 %v819
          %v1076 = vcvt.s32.f32 %v820
          %v1077 = vcvt.s32.f32 %v821
          %v1078 = vcvt.s32.f32 %v822
          %v1079 = vcvt.s32.f32 %v823
          %v1080 = vcvt.s32.f32 %v824
          %v1081 = vcvt.s32.f32 %v825
          %v1082 = vcvt.s32.f32 %v826
          %v1083 = vcvt.s32.f32 %v827
          %v1084 = vcvt.s32.f32 %v828
          %v1085 = vcvt.s32.f32 %v829
          %v1086 = vcvt.s32.f32 %v830
          %v1087 = vcvt.s32.f32 %v831
          %v1088 = vcvt.s32.f32 %v832
          %v1089 = vcvt.s32.f32 %v833
          %v1090 = vcvt.s32.f32 %v834
          %v1091 = vcvt.s32.f32 %v835
          %v1092 = vcvt.s32.f32 %v836
          %v1093 = vcvt.s32.f32 %v837
          %v1094 = vcvt.s32.f32 %v838
          %v1095 = vcvt.s32.f32 %v839
          %v1096 = vcvt.s32.f32 %v840
          %v1097 = vcvt.s32.f32 %v841
          %v1098 = vcvt.s32.f32 %v842
          %v1099 = vcvt.s32.f32 %v843
          %v1100 = vcvt.s32.f32 %v844
          %v1101 = vcvt.s32.f32 %v845
          %v1102 = vcvt.s32.f32 %v846
          %v1103 = vcvt.s32.f32 %v847
          %v1104 = vcvt.s32.f32 %v848
          %v1105 = vcvt.s32.f32 %v849
          %v1106 = vcvt.s32.f32 %v850
          %v1107 = vcvt.s32.f32 %v851
          %v1108 = vcvt.s32.f32 %v852
          %v1109 = vcvt.s32.f32 %v853
          %v1110 = vcvt.s32.f32 %v854
          %v1111 = vcvt.s32.f32 %v855
          %v1112 = vcvt.s32.f32 %v856
          %v1113 = vcvt.s32.f32 %v857
          %v1114 = vcvt.s32.f32 %v858
          %v1115 = vcvt.s32.f32 %v859
          %v1116 = vcvt.s32.f32 %v860
          %v1117 = vcvt.s32.f32 %v861
          %v1118 = vcvt.s32.f32 %v862
          %v1119 = vcvt.s32.f32 %v863
          %v1120 = vcvt.s32.f32 %v864
          %v1121 = vcvt.s32.f32 %v865
          %v1122 = vcvt.s32.f32 %v866
          %v1123 = vcvt.s32.f32 %v867
          %v1124 = vcvt.s32.f32 %v868
          %v1125 = vcvt.s32.f32 %v869
          %v1126 = vcvt.s32.f32 %v870
          %v1127 = vcvt.s32.f32 %v871
          %v1128 = vcvt.s32.f32 %v872
          %v1129 = vcvt.s32.f32 %v873
          %v1130 = vcvt.s32.f32 %v874
          %v1131 = vcvt.s32.f32 %v875
          %v1132 = vcvt.s32.f32 %v876
          %v1133 = vcvt.s32.f32 %v877
          %v1134 = vcvt.s32.f32 %v878
          %v1135 = vcvt.s32.f32 %v879
          %v1136 = vcvt.s32.f32 %v880
          %v1137 = vcvt.s32.f32 %v881
          %v1138 = vcvt.s32.f32 %v882
          %v1139 = vcvt.s32.f32 %v883
          %v1140 = vcvt.s32.f32 %v884
          %v1141 = vcvt.s32.f32 %v885
          %v1142 = vcvt.s32.f32 %v886
          %v1143 = vcvt.s32.f32 %v887
          %v1144 = vcvt.s32.f32 %v888
          %v1145 = vcvt.s32.f32 %v889
          %v1146 = vcvt.s32.f32 %v890
          %v1147 = vcvt.s32.f32 %v891
          %v1148 = vcvt.s32.f32 %v892
          %v1149 = vcvt.s32.f32 %v893
          %v1150 = vcvt.s32.f32 %v894
          %v1151 = vcvt.s32.f32 %v895
          %v1152 = vcvt.s32.f32 %v896
          %v1153 = vcvt.s32.f32 %v897
          %v1154 = vcvt.s32.f32 %v898
          %v1155 = vcvt.s32.f32 %v899
          %v1156 = vcvt.s32.f32 %v900
          %v1157 = vcvt.s32.f32 %v901
          %v1158 = vcvt.s32.f32 %v902
          %v1159 = vcvt.s32.f32 %v903
          %v1160 = vcvt.s32.f32 %v904
          %v1161 = vcvt.s32.f32 %v905
          %v1162 = vcvt.s32.f32 %v906
          %v1163 = vcvt.s32.f32 %v907
          %v1164 = vcvt.s32.f32 %v908
          %v1165 = vcvt.s32.f32 %v909
          %v1166 = vcvt.s32.f32 %v910
          %v1167 = vcvt.s32.f32 %v911
          %v1168 = vcvt.s32.f32 %v912
          %v1169 = vcvt.s32.f32 %v913
          %v1170 = vcvt.s32.f32 %v914
          %v1171 = vcvt.s32.f32 %v915
          %v1172 = vcvt.s32.f32 %v916
          %v1173 = vcvt.s32.f32 %v917
          %v1174 = vcvt.s32.f32 %v918
          %v1175 = vcvt.s32.f32 %v919
          %v1176 = vcvt.s32.f32 %v920
          %v1177 = vcvt.s32.f32 %v921
          %v1178 = vcvt.s32.f32 %v922
          %v1179 = vcvt.s32.f32 %v923
          %v1180 = vcvt.s32.f32 %v924
          %v1181 = vcvt.s32.f32 %v925
          %v1182 = vcvt.s32.f32 %v926
          %v1183 = vcvt.s32.f32 %v927
          %v1184 = vcvt.s32.f32 %v928
          %v1185 = vcvt.s32.f32 %v929
          %v1186 = vcvt.s32.f32 %v930
          %v1187 = vcvt.s32.f32 %v931
          %v1188 = vcvt.s32.f32 %v932
          %v1189 = vcvt.s32.f32 %v933
          %v1190 = vcvt.s32.f32 %v934
          %v1191 = vcvt.s32.f32 %v935
          %v1192 = vcvt.s32.f32 %v936
          %v1193 = vcvt.s32.f32 %v937
          %v1194 = vcvt.s32.f32 %v938
          %v1195 = vcvt.s32.f32 %v939
          %v1196 = vcvt.s32.f32 %v940
          %v1197 = vcvt.s32.f32 %v941
          %v1198 = vcvt.s32.f32 %v942
          %v1199 = vcvt.s32.f32 %v943
          %v1200 = vcvt.s32.f32 %v944
          %v1201 = vcvt.s32.f32 %v945
          %v1202 = vcvt.s32.f32 %v946
          %v1203 = vcvt.s32.f32 %v947
          %v1204 = vcvt.s32.f32 %v948
          %v1205 = vcvt.s32.f32 %v949
          %v1206 = vcvt.s32.f32 %v950
          %v1207 = vcvt.s32.f32 %v951
          %v1208 = vcvt.s32.f32 %v952
          %v1209 = vcvt.s32.f32 %v953
          %v1210 = vcvt.s32.f32 %v954
          %v1211 = vcvt.s32.f32 %v955
          %v1212 = vcvt.s32.f32 %v956
          %v1213 = vcvt.s32.f32 %v957
          %v1214 = vcvt.s32.f32 %v958
          %v1215 = vcvt.s32.f32 %v959
          %v1216 = vcvt.s32.f32 %v960
          %v1217 = vcvt.s32.f32 %v961
          %v1218 = vcvt.s32.f32 %v962
          %v1219 = vld [vmem:[#allocation2] sm:$0xff]
          %v1220 = vld [vmem:[#allocation2 + $0x8] sm:$0xff]
          %v1221 = vld [vmem:[#allocation2 + $0x10] sm:$0xff]
          %v1222 = vld [vmem:[#allocation2 + $0x18] sm:$0xff]
          %v1223 = vld [vmem:[#allocation2 + $0x20] sm:$0xff]
          %v1224 = vld [vmem:[#allocation2 + $0x28] sm:$0xff]
          %v1225 = vld [vmem:[#allocation2 + $0x30] sm:$0xff]
          %v1226 = vld [vmem:[#allocation2 + $0x38] sm:$0xff]
          %v1227 = vld [vmem:[#allocation2 + $0x40] sm:$0xff]
          %v1228 = vld [vmem:[#allocation2 + $0x48] sm:$0xff]
          %v1229 = vld [vmem:[#allocation2 + $0x50] sm:$0xff]
          %v1230 = vld [vmem:[#allocation2 + $0x58] sm:$0xff]
          %v1231 = vld [vmem:[#allocation2 + $0x60] sm:$0xff]
          %v1232 = vld [vmem:[#allocation2 + $0x68] sm:$0xff]
          %v1233 = vld [vmem:[#allocation2 + $0x70] sm:$0xff]
          %v1234 = vld [vmem:[#allocation2 + $0x78] sm:$0xff]
          %v1235 = vld [vmem:[#allocation2 + $0x80] sm:$0xff]
          %v1236 = vld [vmem:[#allocation2 + $0x88] sm:$0xff]
          %v1237 = vld [vmem:[#allocation2 + $0x90] sm:$0xff]
          %v1238 = vld [vmem:[#allocation2 + $0x98] sm:$0xff]
          %v1239 = vld [vmem:[#allocation2 + $0xa0] sm:$0xff]
          %v1240 = vld [vmem:[#allocation2 + $0xa8] sm:$0xff]
          %v1241 = vld [vmem:[#allocation2 + $0xb0] sm:$0xff]
          %v1242 = vld [vmem:[#allocation2 + $0xb8] sm:$0xff]
          %v1243 = vld [vmem:[#allocation2 + $0xc0] sm:$0xff]
          %v1244 = vld [vmem:[#allocation2 + $0xc8] sm:$0xff]
          %v1245 = vld [vmem:[#allocation2 + $0xd0] sm:$0xff]
          %v1246 = vld [vmem:[#allocation2 + $0xd8] sm:$0xff]
          %v1247 = vld [vmem:[#allocation2 + $0xe0] sm:$0xff]
          %v1248 = vld [vmem:[#allocation2 + $0xe8] sm:$0xff]
          %v1249 = vld [vmem:[#allocation2 + $0xf0] sm:$0xff]
          %v1250 = vld [vmem:[#allocation2 + $0xf8] sm:$0xff]
          %v1251 = vld [vmem:[%s269] sm:$0xff]
          %v1252 = vld [vmem:[%s269 + $0x8] sm:$0xff]
          %v1253 = vld [vmem:[%s269 + $0x10] sm:$0xff]
          %v1254 = vld [vmem:[%s269 + $0x18] sm:$0xff]
          %v1255 = vld [vmem:[%s269 + $0x20] sm:$0xff]
          %v1256 = vld [vmem:[%s269 + $0x28] sm:$0xff]
          %v1257 = vld [vmem:[%s269 + $0x30] sm:$0xff]
          %v1258 = vld [vmem:[%s269 + $0x38] sm:$0xff]
          %v1259 = vld [vmem:[%s269 + $0x40] sm:$0xff]
          %v1260 = vld [vmem:[%s269 + $0x48] sm:$0xff]
          %v1261 = vld [vmem:[%s269 + $0x50] sm:$0xff]
          %v1262 = vld [vmem:[%s269 + $0x58] sm:$0xff]
          %v1263 = vld [vmem:[%s269 + $0x60] sm:$0xff]
          %v1264 = vld [vmem:[%s269 + $0x68] sm:$0xff]
          %v1265 = vld [vmem:[%s269 + $0x70] sm:$0xff]
          %v1266 = vld [vmem:[%s269 + $0x78] sm:$0xff]
          %v1267 = vld [vmem:[%s269 + $0x80] sm:$0xff]
          %v1268 = vld [vmem:[%s269 + $0x88] sm:$0xff]
          %v1269 = vld [vmem:[%s269 + $0x90] sm:$0xff]
          %v1270 = vld [vmem:[%s269 + $0x98] sm:$0xff]
          %v1271 = vld [vmem:[%s269 + $0xa0] sm:$0xff]
          %v1272 = vld [vmem:[%s269 + $0xa8] sm:$0xff]
          %v1273 = vld [vmem:[%s269 + $0xb0] sm:$0xff]
          %v1274 = vld [vmem:[%s269 + $0xb8] sm:$0xff]
          %v1275 = vld [vmem:[%s269 + $0xc0] sm:$0xff]
          %v1276 = vld [vmem:[%s269 + $0xc8] sm:$0xff]
          %v1277 = vld [vmem:[%s269 + $0xd0] sm:$0xff]
          %v1278 = vld [vmem:[%s269 + $0xd8] sm:$0xff]
          %v1279 = vld [vmem:[%s269 + $0xe0] sm:$0xff]
          %v1280 = vld [vmem:[%s269 + $0xe8] sm:$0xff]
          %v1281 = vld [vmem:[%s269 + $0xf0] sm:$0xff]
          %v1282 = vld [vmem:[%s269 + $0xf8] sm:$0xff]
          %v1283 = vld [vmem:[%s269 + $0x100] sm:$0xff]
          %v1284 = vld [vmem:[%s269 + $0x108] sm:$0xff]
          %v1285 = vld [vmem:[%s269 + $0x110] sm:$0xff]
          %v1286 = vld [vmem:[%s269 + $0x118] sm:$0xff]
          %v1287 = vld [vmem:[%s269 + $0x120] sm:$0xff]
          %v1288 = vld [vmem:[%s269 + $0x128] sm:$0xff]
          %v1289 = vld [vmem:[%s269 + $0x130] sm:$0xff]
          %v1290 = vld [vmem:[%s269 + $0x138] sm:$0xff]
          %v1291 = vld [vmem:[%s269 + $0x140] sm:$0xff]
          %v1292 = vld [vmem:[%s269 + $0x148] sm:$0xff]
          %v1293 = vld [vmem:[%s269 + $0x150] sm:$0xff]
          %v1294 = vld [vmem:[%s269 + $0x158] sm:$0xff]
          %v1295 = vld [vmem:[%s269 + $0x160] sm:$0xff]
          %v1296 = vld [vmem:[%s269 + $0x168] sm:$0xff]
          %v1297 = vld [vmem:[%s269 + $0x170] sm:$0xff]
          %v1298 = vld [vmem:[%s269 + $0x178] sm:$0xff]
          %v1299 = vld [vmem:[%s269 + $0x180] sm:$0xff]
          %v1300 = vld [vmem:[%s269 + $0x188] sm:$0xff]
          %v1301 = vld [vmem:[%s269 + $0x190] sm:$0xff]
          %v1302 = vld [vmem:[%s269 + $0x198] sm:$0xff]
          %v1303 = vld [vmem:[%s269 + $0x1a0] sm:$0xff]
          %v1304 = vld [vmem:[%s269 + $0x1a8] sm:$0xff]
          %v1305 = vld [vmem:[%s269 + $0x1b0] sm:$0xff]
          %v1306 = vld [vmem:[%s269 + $0x1b8] sm:$0xff]
          %v1307 = vld [vmem:[%s269 + $0x1c0] sm:$0xff]
          %v1308 = vld [vmem:[%s269 + $0x1c8] sm:$0xff]
          %v1309 = vld [vmem:[%s269 + $0x1d0] sm:$0xff]
          %v1310 = vld [vmem:[%s269 + $0x1d8] sm:$0xff]
          %v1311 = vld [vmem:[%s269 + $0x1e0] sm:$0xff]
          %v1312 = vld [vmem:[%s269 + $0x1e8] sm:$0xff]
          %v1313 = vld [vmem:[%s269 + $0x1f0] sm:$0xff]
          %v1314 = vld [vmem:[%s269 + $0x1f8] sm:$0xff]
          %v1315 = vld [vmem:[%s269 + $0x200] sm:$0xff]
          %v1316 = vld [vmem:[%s269 + $0x208] sm:$0xff]
          %v1317 = vld [vmem:[%s269 + $0x210] sm:$0xff]
          %v1318 = vld [vmem:[%s269 + $0x218] sm:$0xff]
          %v1319 = vld [vmem:[%s269 + $0x220] sm:$0xff]
          %v1320 = vld [vmem:[%s269 + $0x228] sm:$0xff]
          %v1321 = vld [vmem:[%s269 + $0x230] sm:$0xff]
          %v1322 = vld [vmem:[%s269 + $0x238] sm:$0xff]
          %v1323 = vld [vmem:[%s269 + $0x240] sm:$0xff]
          %v1324 = vld [vmem:[%s269 + $0x248] sm:$0xff]
          %v1325 = vld [vmem:[%s269 + $0x250] sm:$0xff]
          %v1326 = vld [vmem:[%s269 + $0x258] sm:$0xff]
          %v1327 = vld [vmem:[%s269 + $0x260] sm:$0xff]
          %v1328 = vld [vmem:[%s269 + $0x268] sm:$0xff]
          %v1329 = vld [vmem:[%s269 + $0x270] sm:$0xff]
          %v1330 = vld [vmem:[%s269 + $0x278] sm:$0xff]
          %v1331 = vld [vmem:[%s269 + $0x280] sm:$0xff]
          %v1332 = vld [vmem:[%s269 + $0x288] sm:$0xff]
          %v1333 = vld [vmem:[%s269 + $0x290] sm:$0xff]
          %v1334 = vld [vmem:[%s269 + $0x298] sm:$0xff]
          %v1335 = vld [vmem:[%s269 + $0x2a0] sm:$0xff]
          %v1336 = vld [vmem:[%s269 + $0x2a8] sm:$0xff]
          %v1337 = vld [vmem:[%s269 + $0x2b0] sm:$0xff]
          %v1338 = vld [vmem:[%s269 + $0x2b8] sm:$0xff]
          %v1339 = vld [vmem:[%s269 + $0x2c0] sm:$0xff]
          %v1340 = vld [vmem:[%s269 + $0x2c8] sm:$0xff]
          %v1341 = vld [vmem:[%s269 + $0x2d0] sm:$0xff]
          %v1342 = vld [vmem:[%s269 + $0x2d8] sm:$0xff]
          %v1343 = vld [vmem:[%s269 + $0x2e0] sm:$0xff]
          %v1344 = vld [vmem:[%s269 + $0x2e8] sm:$0xff]
          %v1345 = vld [vmem:[%s269 + $0x2f0] sm:$0xff]
          %v1346 = vld [vmem:[%s269 + $0x2f8] sm:$0xff]
          %v1347 = vld [vmem:[%s269 + $0x300] sm:$0xff]
          %v1348 = vld [vmem:[%s269 + $0x308] sm:$0xff]
          %v1349 = vld [vmem:[%s269 + $0x310] sm:$0xff]
          %v1350 = vld [vmem:[%s269 + $0x318] sm:$0xff]
          %v1351 = vld [vmem:[%s269 + $0x320] sm:$0xff]
          %v1352 = vld [vmem:[%s269 + $0x328] sm:$0xff]
          %v1353 = vld [vmem:[%s269 + $0x330] sm:$0xff]
          %v1354 = vld [vmem:[%s269 + $0x338] sm:$0xff]
          %v1355 = vld [vmem:[%s269 + $0x340] sm:$0xff]
          %v1356 = vld [vmem:[%s269 + $0x348] sm:$0xff]
          %v1357 = vld [vmem:[%s269 + $0x350] sm:$0xff]
          %v1358 = vld [vmem:[%s269 + $0x358] sm:$0xff]
          %v1359 = vld [vmem:[%s269 + $0x360] sm:$0xff]
          %v1360 = vld [vmem:[%s269 + $0x368] sm:$0xff]
          %v1361 = vld [vmem:[%s269 + $0x370] sm:$0xff]
          %v1362 = vld [vmem:[%s269 + $0x378] sm:$0xff]
          %v1363 = vld [vmem:[%s269 + $0x380] sm:$0xff]
          %v1364 = vld [vmem:[%s269 + $0x388] sm:$0xff]
          %v1365 = vld [vmem:[%s269 + $0x390] sm:$0xff]
          %v1366 = vld [vmem:[%s269 + $0x398] sm:$0xff]
          %v1367 = vld [vmem:[%s269 + $0x3a0] sm:$0xff]
          %v1368 = vld [vmem:[%s269 + $0x3a8] sm:$0xff]
          %v1369 = vld [vmem:[%s269 + $0x3b0] sm:$0xff]
          %v1370 = vld [vmem:[%s269 + $0x3b8] sm:$0xff]
          %v1371 = vld [vmem:[%s269 + $0x3c0] sm:$0xff]
          %v1372 = vld [vmem:[%s269 + $0x3c8] sm:$0xff]
          %v1373 = vld [vmem:[%s269 + $0x3d0] sm:$0xff]
          %v1374 = vld [vmem:[%s269 + $0x3d8] sm:$0xff]
          %v1375 = vld [vmem:[%s269 + $0x3e0] sm:$0xff]
          %v1376 = vld [vmem:[%s269 + $0x3e8] sm:$0xff]
          %v1377 = vld [vmem:[%s269 + $0x3f0] sm:$0xff]
          %v1378 = vld [vmem:[%s269 + $0x3f8] sm:$0xff]
          %1379 = vmatprep.subr.mxu0 0.0
          %1380 = vmatpush1.msra.mxu0 %v1251
          %1381 = vmatprep.subr.mxu0 0.0
          %1382 = vmatpush1.msra.mxu0 %v1252
          %1383 = vmatprep.subr.mxu0 0.0
          %1384 = vmatpush1.msra.mxu0 %v1253
          %1385 = vmatprep.subr.mxu0 0.0
          %1386 = vmatpush1.msra.mxu0 %v1254
          %1387 = vmatprep.subr.mxu0 0.0
          %1388 = vmatpush1.msra.mxu0 %v1255
          %1389 = vmatprep.subr.mxu0 0.0
          %1390 = vmatpush1.msra.mxu0 %v1256
          %1391 = vmatprep.subr.mxu0 0.0
          %1392 = vmatpush1.msra.mxu0 %v1257
          %1393 = vmatprep.subr.mxu0 0.0
          %1394 = vmatpush1.msra.mxu0 %v1258
          %1395 = vmatprep.subr.mxu0 0.0
          %1396 = vmatpush1.msra.mxu0 %v1259
          %1397 = vmatprep.subr.mxu0 0.0
          %1398 = vmatpush1.msra.mxu0 %v1260
          %1399 = vmatprep.subr.mxu0 0.0
          %1400 = vmatpush1.msra.mxu0 %v1261
          %1401 = vmatprep.subr.mxu0 0.0
          %1402 = vmatpush1.msra.mxu0 %v1262
          %1403 = vmatprep.subr.mxu0 0.0
          %1404 = vmatpush1.msra.mxu0 %v1263
          %1405 = vmatprep.subr.mxu0 0.0
          %1406 = vmatpush1.msra.mxu0 %v1264
          %1407 = vmatprep.subr.mxu0 0.0
          %1408 = vmatpush1.msra.mxu0 %v1265
          %1409 = vmatprep.subr.mxu0 0.0
          %1410 = vmatpush1.msra.mxu0 %v1266
          %1411 = vmatprep.subr.mxu0 0.0
          %1412 = vmatpush1.msra.mxu0 %v1267
          %1413 = vmatprep.subr.mxu0 0.0
          %1414 = vmatpush1.msra.mxu0 %v1268
          %1415 = vmatprep.subr.mxu0 0.0
          %1416 = vmatpush1.msra.mxu0 %v1269
          %1417 = vmatprep.subr.mxu0 0.0
          %1418 = vmatpush1.msra.mxu0 %v1270
          %1419 = vmatprep.subr.mxu0 0.0
          %1420 = vmatpush1.msra.mxu0 %v1271
          %1421 = vmatprep.subr.mxu0 0.0
          %1422 = vmatpush1.msra.mxu0 %v1272
          %1423 = vmatprep.subr.mxu0 0.0
          %1424 = vmatpush1.msra.mxu0 %v1273
          %1425 = vmatprep.subr.mxu0 0.0
          %1426 = vmatpush1.msra.mxu0 %v1274
          %1427 = vmatprep.subr.mxu0 0.0
          %1428 = vmatpush1.msra.mxu0 %v1275
          %1429 = vmatprep.subr.mxu0 0.0
          %1430 = vmatpush1.msra.mxu0 %v1276
          %1431 = vmatprep.subr.mxu0 0.0
          %1432 = vmatpush1.msra.mxu0 %v1277
          %1433 = vmatprep.subr.mxu0 0.0
          %1434 = vmatpush1.msra.mxu0 %v1278
          %1435 = vmatprep.subr.mxu0 0.0
          %1436 = vmatpush1.msra.mxu0 %v1279
          %1437 = vmatprep.subr.mxu0 0.0
          %1438 = vmatpush1.msra.mxu0 %v1280
          %1439 = vmatprep.subr.mxu0 0.0
          %1440 = vmatpush1.msra.mxu0 %v1281
          %1441 = vmatprep.subr.mxu0 0.0
          %1442 = vmatpush1.msra.mxu0 %v1282
          %1443 = vmatprep.mubr.f32.mxu0 %v964
          %1444 = vmatmul.mubr.f32.gmra.mrb[0].mxu0 %v963
          %v1445 = vpop.f32.mrb[0].mxu0
          %v1446 = vadd.f32 0.0, %v1445
          %v1447 = vpop.f32.mrb[0].mxu0
          %1448 = vmatprep.mubr.f32.mxu0 %v972
          %1449 = vmatmul.mubr.f32.gmra.mrb[0].mxu0 %v971
          %v1450 = vpop.f32.mrb[0].mxu0
          %v1451 = vadd.f32 0.0, %v1450
          %v1452 = vpop.f32.mrb[0].mxu0
          %1453 = vmatprep.mubr.f32.mxu0 %v980
          %1454 = vmatmul.mubr.f32.gmra.mrb[0].mxu0 %v979
          %v1455 = vpop.f32.mrb[0].mxu0
          %v1456 = vadd.f32 0.0, %v1455
          %v1457 = vpop.f32.mrb[0].mxu0
          %1458 = vmatprep.mubr.f32.mxu0 %v988
          %1459 = vmatmul.mubr.f32.gmra.mrb[0].mxu0 %v987
          %v1460 = vpop.f32.mrb[0].mxu0
          %v1461 = vadd.f32 0.0, %v1460
          %v1462 = vpop.f32.mrb[0].mxu0
          %1463 = vmatprep.mubr.f32.mxu0 %v996
          %1464 = vmatmul.mubr.f32.gmra.mrb[0].mxu0 %v995
          %v1465 = vpop.f32.mrb[0].mxu0
          %v1466 = vadd.f32 0.0, %v1465
          %v1467 = vpop.f32.mrb[0].mxu0
          %1468 = vmatprep.mubr.f32.mxu0 %v1004
          %1469 = vmatmul.mubr.f32.gmra.mrb[0].mxu0 %v1003
          %v1470 = vpop.f32.mrb[0].mxu0
          %v1471 = vadd.f32 0.0, %v1470
          %v1472 = vpop.f32.mrb[0].mxu0
          %1473 = vmatprep.mubr.f32.mxu0 %v1012
          %1474 = vmatmul.mubr.f32.gmra.mrb[0].mxu0 %v1011
          %v1475 = vpop.f32.mrb[0].mxu0
          %v1476 = vadd.f32 0.0, %v1475
          %v1477 = vpop.f32.mrb[0].mxu0
          %1478 = vmatprep.mubr.f32.mxu0 %v1020
          %1479 = vmatmul.mubr.f32.gmra.mrb[0].mxu0 %v1019
          %v1480 = vpop.f32.mrb[0].mxu0
          %v1481 = vadd.f32 0.0, %v1480
          %v1482 = vpop.f32.mrb[0].mxu0
          %1483 = vmatprep.mubr.f32.mxu0 %v1028
          %1484 = vmatmul.mubr.f32.gmra.mrb[0].mxu0 %v1027
          %v1485 = vpop.f32.mrb[0].mxu0
          %v1486 = vadd.f32 0.0, %v1485
          %v1487 = vpop.f32.mrb[0].mxu0
          %1488 = vmatprep.mubr.f32.mxu0 %v1036
          %1489 = vmatmul.mubr.f32.gmra.mrb[0].mxu0 %v1035
          %v1490 = vpop.f32.mrb[0].mxu0
          %v1491 = vadd.f32 0.0, %v1490
          %v1492 = vpop.f32.mrb[0].mxu0
          %1493 = vmatprep.mubr.f32.mxu0 %v1044
          %1494 = vmatmul.mubr.f32.gmra.mrb[0].mxu0 %v1043
          %v1495 = vpop.f32.mrb[0].mxu0
          %v1496 = vadd.f32 0.0, %v1495
          %v1497 = vpop.f32.mrb[0].mxu0
          %1498 = vmatprep.mubr.f32.mxu0 %v1052
          %1499 = vmatmul.mubr.f32.gmra.mrb[0].mxu0 %v1051
          %v1500 = vpop.f32.mrb[0].mxu0
          %v1501 = vadd.f32 0.0, %v1500
          %v1502 = vpop.f32.mrb[0].mxu0
          %1503 = vmatprep.mubr.f32.mxu0 %v1060
          %1504 = vmatmul.mubr.f32.gmra.mrb[0].mxu0 %v1059
          %v1505 = vpop.f32.mrb[0].mxu0
          %v1506 = vadd.f32 0.0, %v1505
          %v1507 = vpop.f32.mrb[0].mxu0
          %1508 = vmatprep.mubr.f32.mxu0 %v1068
          %1509 = vmatmul.mubr.f32.gmra.mrb[0].mxu0 %v1067
          %v1510 = vpop.f32.mrb[0].mxu0
          %v1511 = vadd.f32 0.0, %v1510
          %v1512 = vpop.f32.mrb[0].mxu0
          %1513 = vmatprep.mubr.f32.mxu0 %v1076
          %1514 = vmatmul.mubr.f32.gmra.mrb[0].mxu0 %v1075
          %v1515 = vpop.f32.mrb[0].mxu0
          %v1516 = vadd.f32 0.0, %v1515
          %v1517 = vpop.f32.mrb[0].mxu0
          %1518 = vmatprep.mubr.f32.mxu0 %v1084
          %1519 = vmatmul.mubr.f32.gmra.mrb[0].mxu0 %v1083
          %v1520 = vpop.f32.mrb[0].mxu0
          %v1521 = vadd.f32 0.0, %v1520
          %v1522 = vpop.f32.mrb[0].mxu0
          %1523 = vmatprep.mubr.f32.mxu0 %v1092
          %1524 = vmatmul.mubr.f32.gmra.mrb[0].mxu0 %v1091
          %v1525 = vpop.f32.mrb[0].mxu0
          %v1526 = vadd.f32 0.0, %v1525
          %v1527 = vpop.f32.mrb[0].mxu0
          %1528 = vmatprep.mubr.f32.mxu0 %v1100
          %1529 = vmatmul.mubr.f32.gmra.mrb[0].mxu0 %v1099
          %v1530 = vpop.f32.mrb[0].mxu0
          %v1531 = vadd.f32 0.0, %v1530
          %v1532 = vpop.f32.mrb[0].mxu0
          %1533 = vmatprep.mubr.f32.mxu0 %v1108
          %1534 = vmatmul.mubr.f32.gmra.mrb[0].mxu0 %v1107
          %v1535 = vpop.f32.mrb[0].mxu0
          %v1536 = vadd.f32 0.0, %v1535
          %v1537 = vpop.f32.mrb[0].mxu0
          %1538 = vmatprep.mubr.f32.mxu0 %v1116
          %1539 = vmatmul.mubr.f32.gmra.mrb[0].mxu0 %v1115
          %v1540 = vpop.f32.mrb[0].mxu0
          %v1541 = vadd.f32 0.0, %v1540
          %v1542 = vpop.f32.mrb[0].mxu0
          %1543 = vmatprep.mubr.f32.mxu0 %v1124
          %1544 = vmatmul.mubr.f32.gmra.mrb[0].mxu0 %v1123
          %v1545 = vpop.f32.mrb[0].mxu0
          %v1546 = vadd.f32 0.0, %v1545
          %v1547 = vpop.f32.mrb[0].mxu0
          %1548 = vmatprep.mubr.f32.mxu0 %v1132
          %1549 = vmatmul.mubr.f32.gmra.mrb[0].mxu0 %v1131
          %v1550 = vpop.f32.mrb[0].mxu0
          %v1551 = vadd.f32 0.0, %v1550
          %v1552 = vpop.f32.mrb[0].mxu0
          %1553 = vmatprep.mubr.f32.mxu0 %v1140
          %1554 = vmatmul.mubr.f32.gmra.mrb[0].mxu0 %v1139
          %v1555 = vpop.f32.mrb[0].mxu0
          %v1556 = vadd.f32 0.0, %v1555
          %v1557 = vpop.f32.mrb[0].mxu0
          %1558 = vmatprep.mubr.f32.mxu0 %v1148
          %1559 = vmatmul.mubr.f32.gmra.mrb[0].mxu0 %v1147
          %v1560 = vpop.f32.mrb[0].mxu0
          %v1561 = vadd.f32 0.0, %v1560
          %v1562 = vpop.f32.mrb[0].mxu0
          %1563 = vmatprep.mubr.f32.mxu0 %v1156
          %1564 = vmatmul.mubr.f32.gmra.mrb[0].mxu0 %v1155
          %v1565 = vpop.f32.mrb[0].mxu0
          %v1566 = vadd.f32 0.0, %v1565
          %v1567 = vpop.f32.mrb[0].mxu0
          %1568 = vmatprep.mubr.f32.mxu0 %v1164
          %1569 = vmatmul.mubr.f32.gmra.mrb[0].mxu0 %v1163
          %v1570 = vpop.f32.mrb[0].mxu0
          %v1571 = vadd.f32 0.0, %v1570
          %v1572 = vpop.f32.mrb[0].mxu0
          %1573 = vmatprep.mubr.f32.mxu0 %v1172
          %1574 = vmatmul.mubr.f32.gmra.mrb[0].mxu0 %v1171
          %v1575 = vpop.f32.mrb[0].mxu0
          %v1576 = vadd.f32 0.0, %v1575
          %v1577 = vpop.f32.mrb[0].mxu0
          %1578 = vmatprep.mubr.f32.mxu0 %v1180
          %1579 = vmatmul.mubr.f32.gmra.mrb[0].mxu0 %v1179
          %v1580 = vpop.f32.mrb[0].mxu0
          %v1581 = vadd.f32 0.0, %v1580
          %v1582 = vpop.f32.mrb[0].mxu0
          %1583 = vmatprep.mubr.f32.mxu0 %v1188
          %1584 = vmatmul.mubr.f32.gmra.mrb[0].mxu0 %v1187
          %v1585 = vpop.f32.mrb[0].mxu0
          %v1586 = vadd.f32 0.0, %v1585
          %v1587 = vpop.f32.mrb[0].mxu0
          %1588 = vmatprep.mubr.f32.mxu0 %v1196
          %1589 = vmatmul.mubr.f32.gmra.mrb[0].mxu0 %v1195
          %v1590 = vpop.f32.mrb[0].mxu0
          %v1591 = vadd.f32 0.0, %v1590
          %v1592 = vpop.f32.mrb[0].mxu0
          %1593 = vmatprep.mubr.f32.mxu0 %v1204
          %1594 = vmatmul.mubr.f32.gmra.mrb[0].mxu0 %v1203
          %v1595 = vpop.f32.mrb[0].mxu0
          %v1596 = vadd.f32 0.0, %v1595
          %v1597 = vpop.f32.mrb[0].mxu0
          %1598 = vmatprep.mubr.f32.mxu0 %v1212
          %1599 = vmatmul.mubr.f32.gmra.mrb[0].mxu0 %v1211
          %v1600 = vpop.f32.mrb[0].mxu0
          %v1601 = vadd.f32 0.0, %v1600
          %v1602 = vpop.f32.mrb[0].mxu0
          %1603 = vdwg.mxu0
          %1604 = vmatprep.subr.mxu0 0.0
          %1605 = vmatpush1.msra.mxu0 %v1283
          %1606 = vmatprep.subr.mxu0 0.0
          %1607 = vmatpush1.msra.mxu0 %v1284
          %1608 = vmatprep.subr.mxu0 0.0
          %1609 = vmatpush1.msra.mxu0 %v1285
          %1610 = vmatprep.subr.mxu0 0.0
          %1611 = vmatpush1.msra.mxu0 %v1286
          %1612 = vmatprep.subr.mxu0 0.0
          %1613 = vmatpush1.msra.mxu0 %v1287
          %1614 = vmatprep.subr.mxu0 0.0
          %1615 = vmatpush1.msra.mxu0 %v1288
          %1616 = vmatprep.subr.mxu0 0.0
          %1617 = vmatpush1.msra.mxu0 %v1289
          %1618 = vmatprep.subr.mxu0 0.0
          %1619 = vmatpush1.msra.mxu0 %v1290
          %1620 = vmatprep.subr.mxu0 0.0
          %1621 = vmatpush1.msra.mxu0 %v1291
          %1622 = vmatprep.subr.mxu0 0.0
          %1623 = vmatpush1.msra.mxu0 %v1292
          %1624 = vmatprep.subr.mxu0 0.0
          %1625 = vmatpush1.msra.mxu0 %v1293
          %1626 = vmatprep.subr.mxu0 0.0
          %1627 = vmatpush1.msra.mxu0 %v1294
          %1628 = vmatprep.subr.mxu0 0.0
          %1629 = vmatpush1.msra.mxu0 %v1295
          %1630 = vmatprep.subr.mxu0 0.0
          %1631 = vmatpush1.msra.mxu0 %v1296
          %1632 = vmatprep.subr.mxu0 0.0
          %1633 = vmatpush1.msra.mxu0 %v1297
          %1634 = vmatprep.subr.mxu0 0.0
          %1635 = vmatpush1.msra.mxu0 %v1298
          %1636 = vmatprep.subr.mxu0 0.0
          %1637 = vmatpush1.msra.mxu0 %v1299
          %1638 = vmatprep.subr.mxu0 0.0
          %1639 = vmatpush1.msra.mxu0 %v1300
          %1640 = vmatprep.subr.mxu0 0.0
          %1641 = vmatpush1.msra.mxu0 %v1301
          %1642 = vmatprep.subr.mxu0 0.0
          %1643 = vmatpush1.msra.mxu0 %v1302
          %1644 = vmatprep.subr.mxu0 0.0
          %1645 = vmatpush1.msra.mxu0 %v1303
          %1646 = vmatprep.subr.mxu0 0.0
          %1647 = vmatpush1.msra.mxu0 %v1304
          %1648 = vmatprep.subr.mxu0 0.0
          %1649 = vmatpush1.msra.mxu0 %v1305
          %1650 = vmatprep.subr.mxu0 0.0
          %1651 = vmatpush1.msra.mxu0 %v1306
          %1652 = vmatprep.subr.mxu0 0.0
          %1653 = vmatpush1.msra.mxu0 %v1307
          %1654 = vmatprep.subr.mxu0 0.0
          %1655 = vmatpush1.msra.mxu0 %v1308
          %1656 = vmatprep.subr.mxu0 0.0
          %1657 = vmatpush1.msra.mxu0 %v1309
          %1658 = vmatprep.subr.mxu0 0.0
          %1659 = vmatpush1.msra.mxu0 %v1310
          %1660 = vmatprep.subr.mxu0 0.0
          %1661 = vmatpush1.msra.mxu0 %v1311
          %1662 = vmatprep.subr.mxu0 0.0
          %1663 = vmatpush1.msra.mxu0 %v1312
          %1664 = vmatprep.subr.mxu0 0.0
          %1665 = vmatpush1.msra.mxu0 %v1313
          %1666 = vmatprep.subr.mxu0 0.0
          %1667 = vmatpush1.msra.mxu0 %v1314
          %1668 = vmatprep.mubr.f32.mxu0 %v966
          %1669 = vmatmul.mubr.f32.gmra.mrb[0].mxu0 %v965
          %v1670 = vpop.f32.mrb[0].mxu0
          %v1671 = vadd.f32 %v1446, %v1670
          %v1672 = vpop.f32.mrb[0].mxu0
          %1673 = vmatprep.mubr.f32.mxu0 %v974
          %1674 = vmatmul.mubr.f32.gmra.mrb[0].mxu0 %v973
          %v1675 = vpop.f32.mrb[0].mxu0
          %v1676 = vadd.f32 %v1451, %v1675
          %v1677 = vpop.f32.mrb[0].mxu0
          %1678 = vmatprep.mubr.f32.mxu0 %v982
          %1679 = vmatmul.mubr.f32.gmra.mrb[0].mxu0 %v981
          %v1680 = vpop.f32.mrb[0].mxu0
          %v1681 = vadd.f32 %v1456, %v1680
          %v1682 = vpop.f32.mrb[0].mxu0
          %1683 = vmatprep.mubr.f32.mxu0 %v990
          %1684 = vmatmul.mubr.f32.gmra.mrb[0].mxu0 %v989
          %v1685 = vpop.f32.mrb[0].mxu0
          %v1686 = vadd.f32 %v1461, %v1685
          %v1687 = vpop.f32.mrb[0].mxu0
          %1688 = vmatprep.mubr.f32.mxu0 %v998
          %1689 = vmatmul.mubr.f32.gmra.mrb[0].mxu0 %v997
          %v1690 = vpop.f32.mrb[0].mxu0
          %v1691 = vadd.f32 %v1466, %v1690
          %v1692 = vpop.f32.mrb[0].mxu0
          %1693 = vmatprep.mubr.f32.mxu0 %v1006
          %1694 = vmatmul.mubr.f32.gmra.mrb[0].mxu0 %v1005
          %v1695 = vpop.f32.mrb[0].mxu0
          %v1696 = vadd.f32 %v1471, %v1695
          %v1697 = vpop.f32.mrb[0].mxu0
          %1698 = vmatprep.mubr.f32.mxu0 %v1014
          %1699 = vmatmul.mubr.f32.gmra.mrb[0].mxu0 %v1013
          %v1700 = vpop.f32.mrb[0].mxu0
          %v1701 = vadd.f32 %v1476, %v1700
          %v1702 = vpop.f32.mrb[0].mxu0
          %1703 = vmatprep.mubr.f32.mxu0 %v1022
          %1704 = vmatmul.mubr.f32.gmra.mrb[0].mxu0 %v1021
          %v1705 = vpop.f32.mrb[0].mxu0
          %v1706 = vadd.f32 %v1481, %v1705
          %v1707 = vpop.f32.mrb[0].mxu0
          %1708 = vmatprep.mubr.f32.mxu0 %v1030
          %1709 = vmatmul.mubr.f32.gmra.mrb[0].mxu0 %v1029
          %v1710 = vpop.f32.mrb[0].mxu0
          %v1711 = vadd.f32 %v1486, %v1710
          %v1712 = vpop.f32.mrb[0].mxu0
          %1713 = vmatprep.mubr.f32.mxu0 %v1038
          %1714 = vmatmul.mubr.f32.gmra.mrb[0].mxu0 %v1037
          %v1715 = vpop.f32.mrb[0].mxu0
          %v1716 = vadd.f32 %v1491, %v1715
          %v1717 = vpop.f32.mrb[0].mxu0
          %1718 = vmatprep.mubr.f32.mxu0 %v1046
          %1719 = vmatmul.mubr.f32.gmra.mrb[0].mxu0 %v1045
          %v1720 = vpop.f32.mrb[0].mxu0
          %v1721 = vadd.f32 %v1496, %v1720
          %v1722 = vpop.f32.mrb[0].mxu0
          %1723 = vmatprep.mubr.f32.mxu0 %v1054
          %1724 = vmatmul.mubr.f32.gmra.mrb[0].mxu0 %v1053
          %v1725 = vpop.f32.mrb[0].mxu0
          %v1726 = vadd.f32 %v1501, %v1725
          %v1727 = vpop.f32.mrb[0].mxu0
          %1728 = vmatprep.mubr.f32.mxu0 %v1062
          %1729 = vmatmul.mubr.f32.gmra.mrb[0].mxu0 %v1061
          %v1730 = vpop.f32.mrb[0].mxu0
          %v1731 = vadd.f32 %v1506, %v1730
          %v1732 = vpop.f32.mrb[0].mxu0
          %1733 = vmatprep.mubr.f32.mxu0 %v1070
          %1734 = vmatmul.mubr.f32.gmra.mrb[0].mxu0 %v1069
          %v1735 = vpop.f32.mrb[0].mxu0
          %v1736 = vadd.f32 %v1511, %v1735
          %v1737 = vpop.f32.mrb[0].mxu0
          %1738 = vmatprep.mubr.f32.mxu0 %v1078
          %1739 = vmatmul.mubr.f32.gmra.mrb[0].mxu0 %v1077
          %v1740 = vpop.f32.mrb[0].mxu0
          %v1741 = vadd.f32 %v1516, %v1740
          %v1742 = vpop.f32.mrb[0].mxu0
          %1743 = vmatprep.mubr.f32.mxu0 %v1086
          %1744 = vmatmul.mubr.f32.gmra.mrb[0].mxu0 %v1085
          %v1745 = vpop.f32.mrb[0].mxu0
          %v1746 = vadd.f32 %v1521, %v1745
          %v1747 = vpop.f32.mrb[0].mxu0
          %1748 = vmatprep.mubr.f32.mxu0 %v1094
          %1749 = vmatmul.mubr.f32.gmra.mrb[0].mxu0 %v1093
          %v1750 = vpop.f32.mrb[0].mxu0
          %v1751 = vadd.f32 %v1526, %v1750
          %v1752 = vpop.f32.mrb[0].mxu0
          %1753 = vmatprep.mubr.f32.mxu0 %v1102
          %1754 = vmatmul.mubr.f32.gmra.mrb[0].mxu0 %v1101
          %v1755 = vpop.f32.mrb[0].mxu0
          %v1756 = vadd.f32 %v1531, %v1755
          %v1757 = vpop.f32.mrb[0].mxu0
          %1758 = vmatprep.mubr.f32.mxu0 %v1110
          %1759 = vmatmul.mubr.f32.gmra.mrb[0].mxu0 %v1109
          %v1760 = vpop.f32.mrb[0].mxu0
          %v1761 = vadd.f32 %v1536, %v1760
          %v1762 = vpop.f32.mrb[0].mxu0
          %1763 = vmatprep.mubr.f32.mxu0 %v1118
          %1764 = vmatmul.mubr.f32.gmra.mrb[0].mxu0 %v1117
          %v1765 = vpop.f32.mrb[0].mxu0
          %v1766 = vadd.f32 %v1541, %v1765
          %v1767 = vpop.f32.mrb[0].mxu0
          %1768 = vmatprep.mubr.f32.mxu0 %v1126
          %1769 = vmatmul.mubr.f32.gmra.mrb[0].mxu0 %v1125
          %v1770 = vpop.f32.mrb[0].mxu0
          %v1771 = vadd.f32 %v1546, %v1770
          %v1772 = vpop.f32.mrb[0].mxu0
          %1773 = vmatprep.mubr.f32.mxu0 %v1134
          %1774 = vmatmul.mubr.f32.gmra.mrb[0].mxu0 %v1133
          %v1775 = vpop.f32.mrb[0].mxu0
          %v1776 = vadd.f32 %v1551, %v1775
          %v1777 = vpop.f32.mrb[0].mxu0
          %1778 = vmatprep.mubr.f32.mxu0 %v1142
          %1779 = vmatmul.mubr.f32.gmra.mrb[0].mxu0 %v1141
          %v1780 = vpop.f32.mrb[0].mxu0
          %v1781 = vadd.f32 %v1556, %v1780
          %v1782 = vpop.f32.mrb[0].mxu0
          %1783 = vmatprep.mubr.f32.mxu0 %v1150
          %1784 = vmatmul.mubr.f32.gmra.mrb[0].mxu0 %v1149
          %v1785 = vpop.f32.mrb[0].mxu0
          %v1786 = vadd.f32 %v1561, %v1785
          %v1787 = vpop.f32.mrb[0].mxu0
          %1788 = vmatprep.mubr.f32.mxu0 %v1158
          %1789 = vmatmul.mubr.f32.gmra.mrb[0].mxu0 %v1157
          %v1790 = vpop.f32.mrb[0].mxu0
          %v1791 = vadd.f32 %v1566, %v1790
          %v1792 = vpop.f32.mrb[0].mxu0
          %1793 = vmatprep.mubr.f32.mxu0 %v1166
          %1794 = vmatmul.mubr.f32.gmra.mrb[0].mxu0 %v1165
          %v1795 = vpop.f32.mrb[0].mxu0
          %v1796 = vadd.f32 %v1571, %v1795
          %v1797 = vpop.f32.mrb[0].mxu0
          %1798 = vmatprep.mubr.f32.mxu0 %v1174
          %1799 = vmatmul.mubr.f32.gmra.mrb[0].mxu0 %v1173
          %v1800 = vpop.f32.mrb[0].mxu0
          %v1801 = vadd.f32 %v1576, %v1800
          %v1802 = vpop.f32.mrb[0].mxu0
          %1803 = vmatprep.mubr.f32.mxu0 %v1182
          %1804 = vmatmul.mubr.f32.gmra.mrb[0].mxu0 %v1181
          %v1805 = vpop.f32.mrb[0].mxu0
          %v1806 = vadd.f32 %v1581, %v1805
          %v1807 = vpop.f32.mrb[0].mxu0
          %1808 = vmatprep.mubr.f32.mxu0 %v1190
          %1809 = vmatmul.mubr.f32.gmra.mrb[0].mxu0 %v1189
          %v1810 = vpop.f32.mrb[0].mxu0
          %v1811 = vadd.f32 %v1586, %v1810
          %v1812 = vpop.f32.mrb[0].mxu0
          %1813 = vmatprep.mubr.f32.mxu0 %v1198
          %1814 = vmatmul.mubr.f32.gmra.mrb[0].mxu0 %v1197
          %v1815 = vpop.f32.mrb[0].mxu0
          %v1816 = vadd.f32 %v1591, %v1815
          %v1817 = vpop.f32.mrb[0].mxu0
          %1818 = vmatprep.mubr.f32.mxu0 %v1206
          %1819 = vmatmul.mubr.f32.gmra.mrb[0].mxu0 %v1205
          %v1820 = vpop.f32.mrb[0].mxu0
          %v1821 = vadd.f32 %v1596, %v1820
          %v1822 = vpop.f32.mrb[0].mxu0
          %1823 = vmatprep.mubr.f32.mxu0 %v1214
          %1824 = vmatmul.mubr.f32.gmra.mrb[0].mxu0 %v1213
          %v1825 = vpop.f32.mrb[0].mxu0
          %v1826 = vadd.f32 %v1601, %v1825
          %v1827 = vpop.f32.mrb[0].mxu0
          %1828 = vdwg.mxu0
          %1829 = vmatprep.subr.mxu0 0.0
          %1830 = vmatpush1.msra.mxu0 %v1315
          %1831 = vmatprep.subr.mxu0 0.0
          %1832 = vmatpush1.msra.mxu0 %v1316
          %1833 = vmatprep.subr.mxu0 0.0
          %1834 = vmatpush1.msra.mxu0 %v1317
          %1835 = vmatprep.subr.mxu0 0.0
          %1836 = vmatpush1.msra.mxu0 %v1318
          %1837 = vmatprep.subr.mxu0 0.0
          %1838 = vmatpush1.msra.mxu0 %v1319
          %1839 = vmatprep.subr.mxu0 0.0
          %1840 = vmatpush1.msra.mxu0 %v1320
          %1841 = vmatprep.subr.mxu0 0.0
          %1842 = vmatpush1.msra.mxu0 %v1321
          %1843 = vmatprep.subr.mxu0 0.0
          %1844 = vmatpush1.msra.mxu0 %v1322
          %1845 = vmatprep.subr.mxu0 0.0
          %1846 = vmatpush1.msra.mxu0 %v1323
          %1847 = vmatprep.subr.mxu0 0.0
          %1848 = vmatpush1.msra.mxu0 %v1324
          %1849 = vmatprep.subr.mxu0 0.0
          %1850 = vmatpush1.msra.mxu0 %v1325
          %1851 = vmatprep.subr.mxu0 0.0
          %1852 = vmatpush1.msra.mxu0 %v1326
          %1853 = vmatprep.subr.mxu0 0.0
          %1854 = vmatpush1.msra.mxu0 %v1327
          %1855 = vmatprep.subr.mxu0 0.0
          %1856 = vmatpush1.msra.mxu0 %v1328
          %1857 = vmatprep.subr.mxu0 0.0
          %1858 = vmatpush1.msra.mxu0 %v1329
          %1859 = vmatprep.subr.mxu0 0.0
          %1860 = vmatpush1.msra.mxu0 %v1330
          %1861 = vmatprep.subr.mxu0 0.0
          %1862 = vmatpush1.msra.mxu0 %v1331
          %1863 = vmatprep.subr.mxu0 0.0
          %1864 = vmatpush1.msra.mxu0 %v1332
          %1865 = vmatprep.subr.mxu0 0.0
          %1866 = vmatpush1.msra.mxu0 %v1333
          %1867 = vmatprep.subr.mxu0 0.0
          %1868 = vmatpush1.msra.mxu0 %v1334
          %1869 = vmatprep.subr.mxu0 0.0
          %1870 = vmatpush1.msra.mxu0 %v1335
          %1871 = vmatprep.subr.mxu0 0.0
          %1872 = vmatpush1.msra.mxu0 %v1336
          %1873 = vmatprep.subr.mxu0 0.0
          %1874 = vmatpush1.msra.mxu0 %v1337
          %1875 = vmatprep.subr.mxu0 0.0
          %1876 = vmatpush1.msra.mxu0 %v1338
          %1877 = vmatprep.subr.mxu0 0.0
          %1878 = vmatpush1.msra.mxu0 %v1339
          %1879 = vmatprep.subr.mxu0 0.0
          %1880 = vmatpush1.msra.mxu0 %v1340
          %1881 = vmatprep.subr.mxu0 0.0
          %1882 = vmatpush1.msra.mxu0 %v1341
          %1883 = vmatprep.subr.mxu0 0.0
          %1884 = vmatpush1.msra.mxu0 %v1342
          %1885 = vmatprep.subr.mxu0 0.0
          %1886 = vmatpush1.msra.mxu0 %v1343
          %1887 = vmatprep.subr.mxu0 0.0
          %1888 = vmatpush1.msra.mxu0 %v1344
          %1889 = vmatprep.subr.mxu0 0.0
          %1890 = vmatpush1.msra.mxu0 %v1345
          %1891 = vmatprep.subr.mxu0 0.0
          %1892 = vmatpush1.msra.mxu0 %v1346
          %1893 = vmatprep.mubr.f32.mxu0 %v968
          %1894 = vmatmul.mubr.f32.gmra.mrb[0].mxu0 %v967
          %v1895 = vpop.f32.mrb[0].mxu0
          %v1896 = vadd.f32 %v1671, %v1895
          %v1897 = vpop.f32.mrb[0].mxu0
          %1898 = vmatprep.mubr.f32.mxu0 %v976
          %1899 = vmatmul.mubr.f32.gmra.mrb[0].mxu0 %v975
          %v1900 = vpop.f32.mrb[0].mxu0
          %v1901 = vadd.f32 %v1676, %v1900
          %v1902 = vpop.f32.mrb[0].mxu0
          %1903 = vmatprep.mubr.f32.mxu0 %v984
          %1904 = vmatmul.mubr.f32.gmra.mrb[0].mxu0 %v983
          %v1905 = vpop.f32.mrb[0].mxu0
          %v1906 = vadd.f32 %v1681, %v1905
          %v1907 = vpop.f32.mrb[0].mxu0
          %1908 = vmatprep.mubr.f32.mxu0 %v992
          %1909 = vmatmul.mubr.f32.gmra.mrb[0].mxu0 %v991
          %v1910 = vpop.f32.mrb[0].mxu0
          %v1911 = vadd.f32 %v1686, %v1910
          %v1912 = vpop.f32.mrb[0].mxu0
          %1913 = vmatprep.mubr.f32.mxu0 %v1000
          %1914 = vmatmul.mubr.f32.gmra.mrb[0].mxu0 %v999
          %v1915 = vpop.f32.mrb[0].mxu0
          %v1916 = vadd.f32 %v1691, %v1915
          %v1917 = vpop.f32.mrb[0].mxu0
          %1918 = vmatprep.mubr.f32.mxu0 %v1008
          %1919 = vmatmul.mubr.f32.gmra.mrb[0].mxu0 %v1007
          %v1920 = vpop.f32.mrb[0].mxu0
          %v1921 = vadd.f32 %v1696, %v1920
          %v1922 = vpop.f32.mrb[0].mxu0
          %1923 = vmatprep.mubr.f32.mxu0 %v1016
          %1924 = vmatmul.mubr.f32.gmra.mrb[0].mxu0 %v1015
          %v1925 = vpop.f32.mrb[0].mxu0
          %v1926 = vadd.f32 %v1701, %v1925
          %v1927 = vpop.f32.mrb[0].mxu0
          %1928 = vmatprep.mubr.f32.mxu0 %v1024
          %1929 = vmatmul.mubr.f32.gmra.mrb[0].mxu0 %v1023
          %v1930 = vpop.f32.mrb[0].mxu0
          %v1931 = vadd.f32 %v1706, %v1930
          %v1932 = vpop.f32.mrb[0].mxu0
          %1933 = vmatprep.mubr.f32.mxu0 %v1032
          %1934 = vmatmul.mubr.f32.gmra.mrb[0].mxu0 %v1031
          %v1935 = vpop.f32.mrb[0].mxu0
          %v1936 = vadd.f32 %v1711, %v1935
          %v1937 = vpop.f32.mrb[0].mxu0
          %1938 = vmatprep.mubr.f32.mxu0 %v1040
          %1939 = vmatmul.mubr.f32.gmra.mrb[0].mxu0 %v1039
          %v1940 = vpop.f32.mrb[0].mxu0
          %v1941 = vadd.f32 %v1716, %v1940
          %v1942 = vpop.f32.mrb[0].mxu0
          %1943 = vmatprep.mubr.f32.mxu0 %v1048
          %1944 = vmatmul.mubr.f32.gmra.mrb[0].mxu0 %v1047
          %v1945 = vpop.f32.mrb[0].mxu0
          %v1946 = vadd.f32 %v1721, %v1945
          %v1947 = vpop.f32.mrb[0].mxu0
          %1948 = vmatprep.mubr.f32.mxu0 %v1056
          %1949 = vmatmul.mubr.f32.gmra.mrb[0].mxu0 %v1055
          %v1950 = vpop.f32.mrb[0].mxu0
          %v1951 = vadd.f32 %v1726, %v1950
          %v1952 = vpop.f32.mrb[0].mxu0
          %1953 = vmatprep.mubr.f32.mxu0 %v1064
          %1954 = vmatmul.mubr.f32.gmra.mrb[0].mxu0 %v1063
          %v1955 = vpop.f32.mrb[0].mxu0
          %v1956 = vadd.f32 %v1731, %v1955
          %v1957 = vpop.f32.mrb[0].mxu0
          %1958 = vmatprep.mubr.f32.mxu0 %v1072
          %1959 = vmatmul.mubr.f32.gmra.mrb[0].mxu0 %v1071
          %v1960 = vpop.f32.mrb[0].mxu0
          %v1961 = vadd.f32 %v1736, %v1960
          %v1962 = vpop.f32.mrb[0].mxu0
          %1963 = vmatprep.mubr.f32.mxu0 %v1080
          %1964 = vmatmul.mubr.f32.gmra.mrb[0].mxu0 %v1079
          %v1965 = vpop.f32.mrb[0].mxu0
          %v1966 = vadd.f32 %v1741, %v1965
          %v1967 = vpop.f32.mrb[0].mxu0
          %1968 = vmatprep.mubr.f32.mxu0 %v1088
          %1969 = vmatmul.mubr.f32.gmra.mrb[0].mxu0 %v1087
          %v1970 = vpop.f32.mrb[0].mxu0
          %v1971 = vadd.f32 %v1746, %v1970
          %v1972 = vpop.f32.mrb[0].mxu0
          %1973 = vmatprep.mubr.f32.mxu0 %v1096
          %1974 = vmatmul.mubr.f32.gmra.mrb[0].mxu0 %v1095
          %v1975 = vpop.f32.mrb[0].mxu0
          %v1976 = vadd.f32 %v1751, %v1975
          %v1977 = vpop.f32.mrb[0].mxu0
          %1978 = vmatprep.mubr.f32.mxu0 %v1104
          %1979 = vmatmul.mubr.f32.gmra.mrb[0].mxu0 %v1103
          %v1980 = vpop.f32.mrb[0].mxu0
          %v1981 = vadd.f32 %v1756, %v1980
          %v1982 = vpop.f32.mrb[0].mxu0
          %1983 = vmatprep.mubr.f32.mxu0 %v1112
          %1984 = vmatmul.mubr.f32.gmra.mrb[0].mxu0 %v1111
          %v1985 = vpop.f32.mrb[0].mxu0
          %v1986 = vadd.f32 %v1761, %v1985
          %v1987 = vpop.f32.mrb[0].mxu0
          %1988 = vmatprep.mubr.f32.mxu0 %v1120
          %1989 = vmatmul.mubr.f32.gmra.mrb[0].mxu0 %v1119
          %v1990 = vpop.f32.mrb[0].mxu0
          %v1991 = vadd.f32 %v1766, %v1990
          %v1992 = vpop.f32.mrb[0].mxu0
          %1993 = vmatprep.mubr.f32.mxu0 %v1128
          %1994 = vmatmul.mubr.f32.gmra.mrb[0].mxu0 %v1127
          %v1995 = vpop.f32.mrb[0].mxu0
          %v1996 = vadd.f32 %v1771, %v1995
          %v1997 = vpop.f32.mrb[0].mxu0
          %1998 = vmatprep.mubr.f32.mxu0 %v1136
          %1999 = vmatmul.mubr.f32.gmra.mrb[0].mxu0 %v1135
          %v2000 = vpop.f32.mrb[0].mxu0
          %v2001 = vadd.f32 %v1776, %v2000
          %v2002 = vpop.f32.mrb[0].mxu0
          %2003 = vmatprep.mubr.f32.mxu0 %v1144
          %2004 = vmatmul.mubr.f32.gmra.mrb[0].mxu0 %v1143
          %v2005 = vpop.f32.mrb[0].mxu0
          %v2006 = vadd.f32 %v1781, %v2005
          %v2007 = vpop.f32.mrb[0].mxu0
          %2008 = vmatprep.mubr.f32.mxu0 %v1152
          %2009 = vmatmul.mubr.f32.gmra.mrb[0].mxu0 %v1151
          %v2010 = vpop.f32.mrb[0].mxu0
          %v2011 = vadd.f32 %v1786, %v2010
          %v2012 = vpop.f32.mrb[0].mxu0
          %2013 = vmatprep.mubr.f32.mxu0 %v1160
          %2014 = vmatmul.mubr.f32.gmra.mrb[0].mxu0 %v1159
          %v2015 = vpop.f32.mrb[0].mxu0
          %v2016 = vadd.f32 %v1791, %v2015
          %v2017 = vpop.f32.mrb[0].mxu0
          %2018 = vmatprep.mubr.f32.mxu0 %v1168
          %2019 = vmatmul.mubr.f32.gmra.mrb[0].mxu0 %v1167
          %v2020 = vpop.f32.mrb[0].mxu0
          %v2021 = vadd.f32 %v1796, %v2020
          %v2022 = vpop.f32.mrb[0].mxu0
          %2023 = vmatprep.mubr.f32.mxu0 %v1176
          %2024 = vmatmul.mubr.f32.gmra.mrb[0].mxu0 %v1175
          %v2025 = vpop.f32.mrb[0].mxu0
          %v2026 = vadd.f32 %v1801, %v2025
          %v2027 = vpop.f32.mrb[0].mxu0
          %2028 = vmatprep.mubr.f32.mxu0 %v1184
          %2029 = vmatmul.mubr.f32.gmra.mrb[0].mxu0 %v1183
          %v2030 = vpop.f32.mrb[0].mxu0
          %v2031 = vadd.f32 %v1806, %v2030
          %v2032 = vpop.f32.mrb[0].mxu0
          %2033 = vmatprep.mubr.f32.mxu0 %v1192
          %2034 = vmatmul.mubr.f32.gmra.mrb[0].mxu0 %v1191
          %v2035 = vpop.f32.mrb[0].mxu0
          %v2036 = vadd.f32 %v1811, %v2035
          %v2037 = vpop.f32.mrb[0].mxu0
          %2038 = vmatprep.mubr.f32.mxu0 %v1200
          %2039 = vmatmul.mubr.f32.gmra.mrb[0].mxu0 %v1199
          %v2040 = vpop.f32.mrb[0].mxu0
          %v2041 = vadd.f32 %v1816, %v2040
          %v2042 = vpop.f32.mrb[0].mxu0
          %2043 = vmatprep.mubr.f32.mxu0 %v1208
          %2044 = vmatmul.mubr.f32.gmra.mrb[0].mxu0 %v1207
          %v2045 = vpop.f32.mrb[0].mxu0
          %v2046 = vadd.f32 %v1821, %v2045
          %v2047 = vpop.f32.mrb[0].mxu0
          %2048 = vmatprep.mubr.f32.mxu0 %v1216
          %2049 = vmatmul.mubr.f32.gmra.mrb[0].mxu0 %v1215
          %v2050 = vpop.f32.mrb[0].mxu0
          %v2051 = vadd.f32 %v1826, %v2050
          %v2052 = vpop.f32.mrb[0].mxu0
          %2053 = vdwg.mxu0
          %2054 = vmatprep.subr.mxu0 0.0
          %2055 = vmatpush1.msra.mxu0 %v1347
          %2056 = vmatprep.subr.mxu0 0.0
          %2057 = vmatpush1.msra.mxu0 %v1348
          %2058 = vmatprep.subr.mxu0 0.0
          %2059 = vmatpush1.msra.mxu0 %v1349
          %2060 = vmatprep.subr.mxu0 0.0
          %2061 = vmatpush1.msra.mxu0 %v1350
          %2062 = vmatprep.subr.mxu0 0.0
          %2063 = vmatpush1.msra.mxu0 %v1351
          %2064 = vmatprep.subr.mxu0 0.0
          %2065 = vmatpush1.msra.mxu0 %v1352
          %2066 = vmatprep.subr.mxu0 0.0
          %2067 = vmatpush1.msra.mxu0 %v1353
          %2068 = vmatprep.subr.mxu0 0.0
          %2069 = vmatpush1.msra.mxu0 %v1354
          %2070 = vmatprep.subr.mxu0 0.0
          %2071 = vmatpush1.msra.mxu0 %v1355
          %2072 = vmatprep.subr.mxu0 0.0
          %2073 = vmatpush1.msra.mxu0 %v1356
          %2074 = vmatprep.subr.mxu0 0.0
          %2075 = vmatpush1.msra.mxu0 %v1357
          %2076 = vmatprep.subr.mxu0 0.0
          %2077 = vmatpush1.msra.mxu0 %v1358
          %2078 = vmatprep.subr.mxu0 0.0
          %2079 = vmatpush1.msra.mxu0 %v1359
          %2080 = vmatprep.subr.mxu0 0.0
          %2081 = vmatpush1.msra.mxu0 %v1360
          %2082 = vmatprep.subr.mxu0 0.0
          %2083 = vmatpush1.msra.mxu0 %v1361
          %2084 = vmatprep.subr.mxu0 0.0
          %2085 = vmatpush1.msra.mxu0 %v1362
          %2086 = vmatprep.subr.mxu0 0.0
          %2087 = vmatpush1.msra.mxu0 %v1363
          %2088 = vmatprep.subr.mxu0 0.0
          %2089 = vmatpush1.msra.mxu0 %v1364
          %2090 = vmatprep.subr.mxu0 0.0
          %2091 = vmatpush1.msra.mxu0 %v1365
          %2092 = vmatprep.subr.mxu0 0.0
          %2093 = vmatpush1.msra.mxu0 %v1366
          %2094 = vmatprep.subr.mxu0 0.0
          %2095 = vmatpush1.msra.mxu0 %v1367
          %2096 = vmatprep.subr.mxu0 0.0
          %2097 = vmatpush1.msra.mxu0 %v1368
          %2098 = vmatprep.subr.mxu0 0.0
          %2099 = vmatpush1.msra.mxu0 %v1369
          %2100 = vmatprep.subr.mxu0 0.0
          %2101 = vmatpush1.msra.mxu0 %v1370
          %2102 = vmatprep.subr.mxu0 0.0
          %2103 = vmatpush1.msra.mxu0 %v1371
          %2104 = vmatprep.subr.mxu0 0.0
          %2105 = vmatpush1.msra.mxu0 %v1372
          %2106 = vmatprep.subr.mxu0 0.0
          %2107 = vmatpush1.msra.mxu0 %v1373
          %2108 = vmatprep.subr.mxu0 0.0
          %2109 = vmatpush1.msra.mxu0 %v1374
          %2110 = vmatprep.subr.mxu0 0.0
          %2111 = vmatpush1.msra.mxu0 %v1375
          %2112 = vmatprep.subr.mxu0 0.0
          %2113 = vmatpush1.msra.mxu0 %v1376
          %2114 = vmatprep.subr.mxu0 0.0
          %2115 = vmatpush1.msra.mxu0 %v1377
          %2116 = vmatprep.subr.mxu0 0.0
          %2117 = vmatpush1.msra.mxu0 %v1378
          %2118 = vmatprep.mubr.f32.mxu0 %v970
          %2119 = vmatmul.mubr.f32.gmra.mrb[0].mxu0 %v969
          %v2120 = vpop.f32.mrb[0].mxu0
          %v2121 = vadd.f32 %v1896, %v2120
          %v2122 = vpop.f32.mrb[0].mxu0
          %2123 = vmatprep.mubr.f32.mxu0 %v978
          %2124 = vmatmul.mubr.f32.gmra.mrb[0].mxu0 %v977
          %v2125 = vpop.f32.mrb[0].mxu0
          %v2126 = vadd.f32 %v1901, %v2125
          %v2127 = vpop.f32.mrb[0].mxu0
          %2128 = vmatprep.mubr.f32.mxu0 %v986
          %2129 = vmatmul.mubr.f32.gmra.mrb[0].mxu0 %v985
          %v2130 = vpop.f32.mrb[0].mxu0
          %v2131 = vadd.f32 %v1906, %v2130
          %v2132 = vpop.f32.mrb[0].mxu0
          %2133 = vmatprep.mubr.f32.mxu0 %v994
          %2134 = vmatmul.mubr.f32.gmra.mrb[0].mxu0 %v993
          %v2135 = vpop.f32.mrb[0].mxu0
          %v2136 = vadd.f32 %v1911, %v2135
          %v2137 = vpop.f32.mrb[0].mxu0
          %2138 = vmatprep.mubr.f32.mxu0 %v1002
          %2139 = vmatmul.mubr.f32.gmra.mrb[0].mxu0 %v1001
          %v2140 = vpop.f32.mrb[0].mxu0
          %v2141 = vadd.f32 %v1916, %v2140
          %v2142 = vpop.f32.mrb[0].mxu0
          %2143 = vmatprep.mubr.f32.mxu0 %v1010
          %2144 = vmatmul.mubr.f32.gmra.mrb[0].mxu0 %v1009
          %v2145 = vpop.f32.mrb[0].mxu0
          %v2146 = vadd.f32 %v1921, %v2145
          %v2147 = vpop.f32.mrb[0].mxu0
          %2148 = vmatprep.mubr.f32.mxu0 %v1018
          %2149 = vmatmul.mubr.f32.gmra.mrb[0].mxu0 %v1017
          %v2150 = vpop.f32.mrb[0].mxu0
          %v2151 = vadd.f32 %v1926, %v2150
          %v2152 = vpop.f32.mrb[0].mxu0
          %2153 = vmatprep.mubr.f32.mxu0 %v1026
          %2154 = vmatmul.mubr.f32.gmra.mrb[0].mxu0 %v1025
          %v2155 = vpop.f32.mrb[0].mxu0
          %v2156 = vadd.f32 %v1931, %v2155
          %v2157 = vpop.f32.mrb[0].mxu0
          %2158 = vmatprep.mubr.f32.mxu0 %v1034
          %2159 = vmatmul.mubr.f32.gmra.mrb[0].mxu0 %v1033
          %v2160 = vpop.f32.mrb[0].mxu0
          %v2161 = vadd.f32 %v1936, %v2160
          %v2162 = vpop.f32.mrb[0].mxu0
          %2163 = vmatprep.mubr.f32.mxu0 %v1042
          %2164 = vmatmul.mubr.f32.gmra.mrb[0].mxu0 %v1041
          %v2165 = vpop.f32.mrb[0].mxu0
          %v2166 = vadd.f32 %v1941, %v2165
          %v2167 = vpop.f32.mrb[0].mxu0
          %2168 = vmatprep.mubr.f32.mxu0 %v1050
          %2169 = vmatmul.mubr.f32.gmra.mrb[0].mxu0 %v1049
          %v2170 = vpop.f32.mrb[0].mxu0
          %v2171 = vadd.f32 %v1946, %v2170
          %v2172 = vpop.f32.mrb[0].mxu0
          %2173 = vmatprep.mubr.f32.mxu0 %v1058
          %2174 = vmatmul.mubr.f32.gmra.mrb[0].mxu0 %v1057
          %v2175 = vpop.f32.mrb[0].mxu0
          %v2176 = vadd.f32 %v1951, %v2175
          %v2177 = vpop.f32.mrb[0].mxu0
          %2178 = vmatprep.mubr.f32.mxu0 %v1066
          %2179 = vmatmul.mubr.f32.gmra.mrb[0].mxu0 %v1065
          %v2180 = vpop.f32.mrb[0].mxu0
          %v2181 = vadd.f32 %v1956, %v2180
          %v2182 = vpop.f32.mrb[0].mxu0
          %2183 = vmatprep.mubr.f32.mxu0 %v1074
          %2184 = vmatmul.mubr.f32.gmra.mrb[0].mxu0 %v1073
          %v2185 = vpop.f32.mrb[0].mxu0
          %v2186 = vadd.f32 %v1961, %v2185
          %v2187 = vpop.f32.mrb[0].mxu0
          %2188 = vmatprep.mubr.f32.mxu0 %v1082
          %2189 = vmatmul.mubr.f32.gmra.mrb[0].mxu0 %v1081
          %v2190 = vpop.f32.mrb[0].mxu0
          %v2191 = vadd.f32 %v1966, %v2190
          %v2192 = vpop.f32.mrb[0].mxu0
          %2193 = vmatprep.mubr.f32.mxu0 %v1090
          %2194 = vmatmul.mubr.f32.gmra.mrb[0].mxu0 %v1089
          %v2195 = vpop.f32.mrb[0].mxu0
          %v2196 = vadd.f32 %v1971, %v2195
          %v2197 = vpop.f32.mrb[0].mxu0
          %2198 = vmatprep.mubr.f32.mxu0 %v1098
          %2199 = vmatmul.mubr.f32.gmra.mrb[0].mxu0 %v1097
          %v2200 = vpop.f32.mrb[0].mxu0
          %v2201 = vadd.f32 %v1976, %v2200
          %v2202 = vpop.f32.mrb[0].mxu0
          %2203 = vmatprep.mubr.f32.mxu0 %v1106
          %2204 = vmatmul.mubr.f32.gmra.mrb[0].mxu0 %v1105
          %v2205 = vpop.f32.mrb[0].mxu0
          %v2206 = vadd.f32 %v1981, %v2205
          %v2207 = vpop.f32.mrb[0].mxu0
          %2208 = vmatprep.mubr.f32.mxu0 %v1114
          %2209 = vmatmul.mubr.f32.gmra.mrb[0].mxu0 %v1113
          %v2210 = vpop.f32.mrb[0].mxu0
          %v2211 = vadd.f32 %v1986, %v2210
          %v2212 = vpop.f32.mrb[0].mxu0
          %2213 = vmatprep.mubr.f32.mxu0 %v1122
          %2214 = vmatmul.mubr.f32.gmra.mrb[0].mxu0 %v1121
          %v2215 = vpop.f32.mrb[0].mxu0
          %v2216 = vadd.f32 %v1991, %v2215
          %v2217 = vpop.f32.mrb[0].mxu0
          %2218 = vmatprep.mubr.f32.mxu0 %v1130
          %2219 = vmatmul.mubr.f32.gmra.mrb[0].mxu0 %v1129
          %v2220 = vpop.f32.mrb[0].mxu0
          %v2221 = vadd.f32 %v1996, %v2220
          %v2222 = vpop.f32.mrb[0].mxu0
          %2223 = vmatprep.mubr.f32.mxu0 %v1138
          %2224 = vmatmul.mubr.f32.gmra.mrb[0].mxu0 %v1137
          %v2225 = vpop.f32.mrb[0].mxu0
          %v2226 = vadd.f32 %v2001, %v2225
          %v2227 = vpop.f32.mrb[0].mxu0
          %2228 = vmatprep.mubr.f32.mxu0 %v1146
          %2229 = vmatmul.mubr.f32.gmra.mrb[0].mxu0 %v1145
          %v2230 = vpop.f32.mrb[0].mxu0
          %v2231 = vadd.f32 %v2006, %v2230
          %v2232 = vpop.f32.mrb[0].mxu0
          %2233 = vmatprep.mubr.f32.mxu0 %v1154
          %2234 = vmatmul.mubr.f32.gmra.mrb[0].mxu0 %v1153
          %v2235 = vpop.f32.mrb[0].mxu0
          %v2236 = vadd.f32 %v2011, %v2235
          %v2237 = vpop.f32.mrb[0].mxu0
          %2238 = vmatprep.mubr.f32.mxu0 %v1162
          %2239 = vmatmul.mubr.f32.gmra.mrb[0].mxu0 %v1161
          %v2240 = vpop.f32.mrb[0].mxu0
          %v2241 = vadd.f32 %v2016, %v2240
          %v2242 = vpop.f32.mrb[0].mxu0
          %2243 = vmatprep.mubr.f32.mxu0 %v1170
          %2244 = vmatmul.mubr.f32.gmra.mrb[0].mxu0 %v1169
          %v2245 = vpop.f32.mrb[0].mxu0
          %v2246 = vadd.f32 %v2021, %v2245
          %v2247 = vpop.f32.mrb[0].mxu0
          %2248 = vmatprep.mubr.f32.mxu0 %v1178
          %2249 = vmatmul.mubr.f32.gmra.mrb[0].mxu0 %v1177
          %v2250 = vpop.f32.mrb[0].mxu0
          %v2251 = vadd.f32 %v2026, %v2250
          %v2252 = vpop.f32.mrb[0].mxu0
          %2253 = vmatprep.mubr.f32.mxu0 %v1186
          %2254 = vmatmul.mubr.f32.gmra.mrb[0].mxu0 %v1185
          %v2255 = vpop.f32.mrb[0].mxu0
          %v2256 = vadd.f32 %v2031, %v2255
          %v2257 = vpop.f32.mrb[0].mxu0
          %2258 = vmatprep.mubr.f32.mxu0 %v1194
          %2259 = vmatmul.mubr.f32.gmra.mrb[0].mxu0 %v1193
          %v2260 = vpop.f32.mrb[0].mxu0
          %v2261 = vadd.f32 %v2036, %v2260
          %v2262 = vpop.f32.mrb[0].mxu0
          %2263 = vmatprep.mubr.f32.mxu0 %v1202
          %2264 = vmatmul.mubr.f32.gmra.mrb[0].mxu0 %v1201
          %v2265 = vpop.f32.mrb[0].mxu0
          %v2266 = vadd.f32 %v2041, %v2265
          %v2267 = vpop.f32.mrb[0].mxu0
          %2268 = vmatprep.mubr.f32.mxu0 %v1210
          %2269 = vmatmul.mubr.f32.gmra.mrb[0].mxu0 %v1209
          %v2270 = vpop.f32.mrb[0].mxu0
          %v2271 = vadd.f32 %v2046, %v2270
          %v2272 = vpop.f32.mrb[0].mxu0
          %2273 = vmatprep.mubr.f32.mxu0 %v1218
          %2274 = vmatmul.mubr.f32.gmra.mrb[0].mxu0 %v1217
          %v2275 = vpop.f32.mrb[0].mxu0
          %v2276 = vadd.f32 %v2051, %v2275
          %v2277 = vpop.f32.mrb[0].mxu0
          %2278 = vdwg.mxu0
          %v2279 = vadd.f32 %v1219, %v2121
          %v2280 = vadd.f32 %v1220, %v2126
          %v2281 = vadd.f32 %v1221, %v2131
          %v2282 = vadd.f32 %v1222, %v2136
          %v2283 = vadd.f32 %v1223, %v2141
          %v2284 = vadd.f32 %v1224, %v2146
          %v2285 = vadd.f32 %v1225, %v2151
          %v2286 = vadd.f32 %v1226, %v2156
          %v2287 = vadd.f32 %v1227, %v2161
          %v2288 = vadd.f32 %v1228, %v2166
          %v2289 = vadd.f32 %v1229, %v2171
          %v2290 = vadd.f32 %v1230, %v2176
          %v2291 = vadd.f32 %v1231, %v2181
          %v2292 = vadd.f32 %v1232, %v2186
          %v2293 = vadd.f32 %v1233, %v2191
          %v2294 = vadd.f32 %v1234, %v2196
          %v2295 = vadd.f32 %v1235, %v2201
          %v2296 = vadd.f32 %v1236, %v2206
          %v2297 = vadd.f32 %v1237, %v2211
          %v2298 = vadd.f32 %v1238, %v2216
          %v2299 = vadd.f32 %v1239, %v2221
          %v2300 = vadd.f32 %v1240, %v2226
          %v2301 = vadd.f32 %v1241, %v2231
          %v2302 = vadd.f32 %v1242, %v2236
          %v2303 = vadd.f32 %v1243, %v2241
          %v2304 = vadd.f32 %v1244, %v2246
          %v2305 = vadd.f32 %v1245, %v2251
          %v2306 = vadd.f32 %v1246, %v2256
          %v2307 = vadd.f32 %v1247, %v2261
          %v2308 = vadd.f32 %v1248, %v2266
          %v2309 = vadd.f32 %v1249, %v2271
          %v2310 = vadd.f32 %v1250, %v2276
          %2311 = vst [vmem:[#allocation2] sm:$0xff] %v2279
          %2312 = vst [vmem:[#allocation2 + $0x8] sm:$0xff] %v2280
          %2313 = vst [vmem:[#allocation2 + $0x10] sm:$0xff] %v2281
          %2314 = vst [vmem:[#allocation2 + $0x18] sm:$0xff] %v2282
          %2315 = vst [vmem:[#allocation2 + $0x20] sm:$0xff] %v2283
          %2316 = vst [vmem:[#allocation2 + $0x28] sm:$0xff] %v2284
          %2317 = vst [vmem:[#allocation2 + $0x30] sm:$0xff] %v2285
          %2318 = vst [vmem:[#allocation2 + $0x38] sm:$0xff] %v2286
          %2319 = vst [vmem:[#allocation2 + $0x40] sm:$0xff] %v2287
          %2320 = vst [vmem:[#allocation2 + $0x48] sm:$0xff] %v2288
          %2321 = vst [vmem:[#allocation2 + $0x50] sm:$0xff] %v2289
          %2322 = vst [vmem:[#allocation2 + $0x58] sm:$0xff] %v2290
          %2323 = vst [vmem:[#allocation2 + $0x60] sm:$0xff] %v2291
          %2324 = vst [vmem:[#allocation2 + $0x68] sm:$0xff] %v2292
          %2325 = vst [vmem:[#allocation2 + $0x70] sm:$0xff] %v2293
          %2326 = vst [vmem:[#allocation2 + $0x78] sm:$0xff] %v2294
          %2327 = vst [vmem:[#allocation2 + $0x80] sm:$0xff] %v2295
          %2328 = vst [vmem:[#allocation2 + $0x88] sm:$0xff] %v2296
          %2329 = vst [vmem:[#allocation2 + $0x90] sm:$0xff] %v2297
          %2330 = vst [vmem:[#allocation2 + $0x98] sm:$0xff] %v2298
          %2331 = vst [vmem:[#allocation2 + $0xa0] sm:$0xff] %v2299
          %2332 = vst [vmem:[#allocation2 + $0xa8] sm:$0xff] %v2300
          %2333 = vst [vmem:[#allocation2 + $0xb0] sm:$0xff] %v2301
          %2334 = vst [vmem:[#allocation2 + $0xb8] sm:$0xff] %v2302
          %2335 = vst [vmem:[#allocation2 + $0xc0] sm:$0xff] %v2303
          %2336 = vst [vmem:[#allocation2 + $0xc8] sm:$0xff] %v2304
          %2337 = vst [vmem:[#allocation2 + $0xd0] sm:$0xff] %v2305
          %2338 = vst [vmem:[#allocation2 + $0xd8] sm:$0xff] %v2306
          %2339 = vst [vmem:[#allocation2 + $0xe0] sm:$0xff] %v2307
          %2340 = vst [vmem:[#allocation2 + $0xe8] sm:$0xff] %v2308
          %2341 = vst [vmem:[#allocation2 + $0xf0] sm:$0xff] %v2309
          %2342 = vst [vmem:[#allocation2 + $0xf8] sm:$0xff] %v2310
        $region48: #{tpu_custom_call.1} parent=31 // pred_fallthru
          _
        %s2343 = sadd.s32 %s331, 1
        %s2344 = sld [smem:[#allocation4 + %s2343]]
        %p2345 = scmp.ne.s32.totalorder %s2344, %s332
        // Predicated region
        $region49: #{tpu_custom_call.1} parent=31 // pred_check
          %p2346 = pneg %p2345
        $region50: #{tpu_custom_call.1} parent=31 // pred_check_branch
          %2348 = sbr.rel (%p2346) target = $region52
        $region51: #{tpu_custom_call.1} parent=31 // pred_region
          %v2349 = vld [vmem:[#allocation2] sm:$0xff]
          %v2350 = vld [vmem:[#allocation2 + $0x8] sm:$0xff]
          %v2351 = vld [vmem:[#allocation2 + $0x10] sm:$0xff]
          %v2352 = vld [vmem:[#allocation2 + $0x18] sm:$0xff]
          %v2353 = vld [vmem:[#allocation2 + $0x20] sm:$0xff]
          %v2354 = vld [vmem:[#allocation2 + $0x28] sm:$0xff]
          %v2355 = vld [vmem:[#allocation2 + $0x30] sm:$0xff]
          %v2356 = vld [vmem:[#allocation2 + $0x38] sm:$0xff]
          %v2357 = vld [vmem:[#allocation2 + $0x40] sm:$0xff]
          %v2358 = vld [vmem:[#allocation2 + $0x48] sm:$0xff]
          %v2359 = vld [vmem:[#allocation2 + $0x50] sm:$0xff]
          %v2360 = vld [vmem:[#allocation2 + $0x58] sm:$0xff]
          %v2361 = vld [vmem:[#allocation2 + $0x60] sm:$0xff]
          %v2362 = vld [vmem:[#allocation2 + $0x68] sm:$0xff]
          %v2363 = vld [vmem:[#allocation2 + $0x70] sm:$0xff]
          %v2364 = vld [vmem:[#allocation2 + $0x78] sm:$0xff]
          %v2365 = vld [vmem:[#allocation2 + $0x80] sm:$0xff]
          %v2366 = vld [vmem:[#allocation2 + $0x88] sm:$0xff]
          %v2367 = vld [vmem:[#allocation2 + $0x90] sm:$0xff]
          %v2368 = vld [vmem:[#allocation2 + $0x98] sm:$0xff]
          %v2369 = vld [vmem:[#allocation2 + $0xa0] sm:$0xff]
          %v2370 = vld [vmem:[#allocation2 + $0xa8] sm:$0xff]
          %v2371 = vld [vmem:[#allocation2 + $0xb0] sm:$0xff]
          %v2372 = vld [vmem:[#allocation2 + $0xb8] sm:$0xff]
          %v2373 = vld [vmem:[#allocation2 + $0xc0] sm:$0xff]
          %v2374 = vld [vmem:[#allocation2 + $0xc8] sm:$0xff]
          %v2375 = vld [vmem:[#allocation2 + $0xd0] sm:$0xff]
          %v2376 = vld [vmem:[#allocation2 + $0xd8] sm:$0xff]
          %v2377 = vld [vmem:[#allocation2 + $0xe0] sm:$0xff]
          %v2378 = vld [vmem:[#allocation2 + $0xe8] sm:$0xff]
          %v2379 = vld [vmem:[#allocation2 + $0xf0] sm:$0xff]
          %v2380 = vld [vmem:[#allocation2 + $0xf8] sm:$0xff]
          %v2381 = vld [vmem:[%s320] sm:$0xff]
          %v2382 = vld [vmem:[%s320 + $0x8] sm:$0xff]
          %v2383 = vld [vmem:[%s320 + $0x10] sm:$0xff]
          %v2384 = vld [vmem:[%s320 + $0x18] sm:$0xff]
          %v2385 = vld [vmem:[%s320 + $0x20] sm:$0xff]
          %v2386 = vld [vmem:[%s320 + $0x28] sm:$0xff]
          %v2387 = vld [vmem:[%s320 + $0x30] sm:$0xff]
          %v2388 = vld [vmem:[%s320 + $0x38] sm:$0xff]
          %v2389 = vld [vmem:[%s320 + $0x40] sm:$0xff]
          %v2390 = vld [vmem:[%s320 + $0x48] sm:$0xff]
          %v2391 = vld [vmem:[%s320 + $0x50] sm:$0xff]
          %v2392 = vld [vmem:[%s320 + $0x58] sm:$0xff]
          %v2393 = vld [vmem:[%s320 + $0x60] sm:$0xff]
          %v2394 = vld [vmem:[%s320 + $0x68] sm:$0xff]
          %v2395 = vld [vmem:[%s320 + $0x70] sm:$0xff]
          %v2396 = vld [vmem:[%s320 + $0x78] sm:$0xff]
          %v2397 = vld [vmem:[%s320 + $0x80] sm:$0xff]
          %v2398 = vld [vmem:[%s320 + $0x88] sm:$0xff]
          %v2399 = vld [vmem:[%s320 + $0x90] sm:$0xff]
          %v2400 = vld [vmem:[%s320 + $0x98] sm:$0xff]
          %v2401 = vld [vmem:[%s320 + $0xa0] sm:$0xff]
          %v2402 = vld [vmem:[%s320 + $0xa8] sm:$0xff]
          %v2403 = vld [vmem:[%s320 + $0xb0] sm:$0xff]
          %v2404 = vld [vmem:[%s320 + $0xb8] sm:$0xff]
          %v2405 = vld [vmem:[%s320 + $0xc0] sm:$0xff]
          %v2406 = vld [vmem:[%s320 + $0xc8] sm:$0xff]
          %v2407 = vld [vmem:[%s320 + $0xd0] sm:$0xff]
          %v2408 = vld [vmem:[%s320 + $0xd8] sm:$0xff]
          %v2409 = vld [vmem:[%s320 + $0xe0] sm:$0xff]
          %v2410 = vld [vmem:[%s320 + $0xe8] sm:$0xff]
          %v2411 = vld [vmem:[%s320 + $0xf0] sm:$0xff]
          %v2412 = vld [vmem:[%s320 + $0xf8] sm:$0xff]
          %2414 = vset.pattern.permute.xlu0 0
          %2415 = vperm.xlu0 %2414, %v2381
          %v2416 = vpop.permute.xlu0 %2415
          %2419 = vset.pattern.permute.xlu0 0
          %2420 = vperm.xlu0 %2419, %v2382
          %v2421 = vpop.permute.xlu0 %2420
          %2424 = vset.pattern.permute.xlu0 0
          %2425 = vperm.xlu0 %2424, %v2383
          %v2426 = vpop.permute.xlu0 %2425
          %2429 = vset.pattern.permute.xlu0 0
          %2430 = vperm.xlu0 %2429, %v2384
          %v2431 = vpop.permute.xlu0 %2430
          %2434 = vset.pattern.permute.xlu0 0
          %2435 = vperm.xlu0 %2434, %v2385
          %v2436 = vpop.permute.xlu0 %2435
          %2439 = vset.pattern.permute.xlu0 0
          %2440 = vperm.xlu0 %2439, %v2386
          %v2441 = vpop.permute.xlu0 %2440
          %2444 = vset.pattern.permute.xlu0 0
          %2445 = vperm.xlu0 %2444, %v2387
          %v2446 = vpop.permute.xlu0 %2445
          %2449 = vset.pattern.permute.xlu0 0
          %2450 = vperm.xlu0 %2449, %v2388
          %v2451 = vpop.permute.xlu0 %2450
          %2454 = vset.pattern.permute.xlu0 0
          %2455 = vperm.xlu0 %2454, %v2389
          %v2456 = vpop.permute.xlu0 %2455
          %2459 = vset.pattern.permute.xlu0 0
          %2460 = vperm.xlu0 %2459, %v2390
          %v2461 = vpop.permute.xlu0 %2460
          %2464 = vset.pattern.permute.xlu0 0
          %2465 = vperm.xlu0 %2464, %v2391
          %v2466 = vpop.permute.xlu0 %2465
          %2469 = vset.pattern.permute.xlu0 0
          %2470 = vperm.xlu0 %2469, %v2392
          %v2471 = vpop.permute.xlu0 %2470
          %2474 = vset.pattern.permute.xlu0 0
          %2475 = vperm.xlu0 %2474, %v2393
          %v2476 = vpop.permute.xlu0 %2475
          %2479 = vset.pattern.permute.xlu0 0
          %2480 = vperm.xlu0 %2479, %v2394
          %v2481 = vpop.permute.xlu0 %2480
          %2484 = vset.pattern.permute.xlu0 0
          %2485 = vperm.xlu0 %2484, %v2395
          %v2486 = vpop.permute.xlu0 %2485
          %2489 = vset.pattern.permute.xlu0 0
          %2490 = vperm.xlu0 %2489, %v2396
          %v2491 = vpop.permute.xlu0 %2490
          %2494 = vset.pattern.permute.xlu0 0
          %2495 = vperm.xlu0 %2494, %v2397
          %v2496 = vpop.permute.xlu0 %2495
          %2499 = vset.pattern.permute.xlu0 0
          %2500 = vperm.xlu0 %2499, %v2398
          %v2501 = vpop.permute.xlu0 %2500
          %2504 = vset.pattern.permute.xlu0 0
          %2505 = vperm.xlu0 %2504, %v2399
          %v2506 = vpop.permute.xlu0 %2505
          %2509 = vset.pattern.permute.xlu0 0
          %2510 = vperm.xlu0 %2509, %v2400
          %v2511 = vpop.permute.xlu0 %2510
          %2514 = vset.pattern.permute.xlu0 0
          %2515 = vperm.xlu0 %2514, %v2401
          %v2516 = vpop.permute.xlu0 %2515
          %2519 = vset.pattern.permute.xlu0 0
          %2520 = vperm.xlu0 %2519, %v2402
          %v2521 = vpop.permute.xlu0 %2520
          %2524 = vset.pattern.permute.xlu0 0
          %2525 = vperm.xlu0 %2524, %v2403
          %v2526 = vpop.permute.xlu0 %2525
          %2529 = vset.pattern.permute.xlu0 0
          %2530 = vperm.xlu0 %2529, %v2404
          %v2531 = vpop.permute.xlu0 %2530
          %2534 = vset.pattern.permute.xlu0 0
          %2535 = vperm.xlu0 %2534, %v2405
          %v2536 = vpop.permute.xlu0 %2535
          %2539 = vset.pattern.permute.xlu0 0
          %2540 = vperm.xlu0 %2539, %v2406
          %v2541 = vpop.permute.xlu0 %2540
          %2544 = vset.pattern.permute.xlu0 0
          %2545 = vperm.xlu0 %2544, %v2407
          %v2546 = vpop.permute.xlu0 %2545
          %2549 = vset.pattern.permute.xlu0 0
          %2550 = vperm.xlu0 %2549, %v2408
          %v2551 = vpop.permute.xlu0 %2550
          %2554 = vset.pattern.permute.xlu0 0
          %2555 = vperm.xlu0 %2554, %v2409
          %v2556 = vpop.permute.xlu0 %2555
          %2559 = vset.pattern.permute.xlu0 0
          %2560 = vperm.xlu0 %2559, %v2410
          %v2561 = vpop.permute.xlu0 %2560
          %2564 = vset.pattern.permute.xlu0 0
          %2565 = vperm.xlu0 %2564, %v2411
          %v2566 = vpop.permute.xlu0 %2565
          %2569 = vset.pattern.permute.xlu0 0
          %2570 = vperm.xlu0 %2569, %v2412
          %v2571 = vpop.permute.xlu0 %2570
          %v2573 = vmul.f32 %v2349, %v2416
          %v2574 = vmul.f32 %v2350, %v2421
          %v2575 = vmul.f32 %v2351, %v2426
          %v2576 = vmul.f32 %v2352, %v2431
          %v2577 = vmul.f32 %v2353, %v2436
          %v2578 = vmul.f32 %v2354, %v2441
          %v2579 = vmul.f32 %v2355, %v2446
          %v2580 = vmul.f32 %v2356, %v2451
          %v2581 = vmul.f32 %v2357, %v2456
          %v2582 = vmul.f32 %v2358, %v2461
          %v2583 = vmul.f32 %v2359, %v2466
          %v2584 = vmul.f32 %v2360, %v2471
          %v2585 = vmul.f32 %v2361, %v2476
          %v2586 = vmul.f32 %v2362, %v2481
          %v2587 = vmul.f32 %v2363, %v2486
          %v2588 = vmul.f32 %v2364, %v2491
          %v2589 = vmul.f32 %v2365, %v2496
          %v2590 = vmul.f32 %v2366, %v2501
          %v2591 = vmul.f32 %v2367, %v2506
          %v2592 = vmul.f32 %v2368, %v2511
          %v2593 = vmul.f32 %v2369, %v2516
          %v2594 = vmul.f32 %v2370, %v2521
          %v2595 = vmul.f32 %v2371, %v2526
          %v2596 = vmul.f32 %v2372, %v2531
          %v2597 = vmul.f32 %v2373, %v2536
          %v2598 = vmul.f32 %v2374, %v2541
          %v2599 = vmul.f32 %v2375, %v2546
          %v2600 = vmul.f32 %v2376, %v2551
          %v2601 = vmul.f32 %v2377, %v2556
          %v2602 = vmul.f32 %v2378, %v2561
          %v2603 = vmul.f32 %v2379, %v2566
          %v2604 = vmul.f32 %v2380, %v2571
          %2605 = vst [vmem:[%s304] sm:$0xff] %v2573
          %2606 = vst [vmem:[%s304 + $0x8] sm:$0xff] %v2574
          %2607 = vst [vmem:[%s304 + $0x10] sm:$0xff] %v2575
          %2608 = vst [vmem:[%s304 + $0x18] sm:$0xff] %v2576
          %2609 = vst [vmem:[%s304 + $0x20] sm:$0xff] %v2577
          %2610 = vst [vmem:[%s304 + $0x28] sm:$0xff] %v2578
          %2611 = vst [vmem:[%s304 + $0x30] sm:$0xff] %v2579
          %2612 = vst [vmem:[%s304 + $0x38] sm:$0xff] %v2580
          %2613 = vst [vmem:[%s304 + $0x40] sm:$0xff] %v2581
          %2614 = vst [vmem:[%s304 + $0x48] sm:$0xff] %v2582
          %2615 = vst [vmem:[%s304 + $0x50] sm:$0xff] %v2583
          %2616 = vst [vmem:[%s304 + $0x58] sm:$0xff] %v2584
          %2617 = vst [vmem:[%s304 + $0x60] sm:$0xff] %v2585
          %2618 = vst [vmem:[%s304 + $0x68] sm:$0xff] %v2586
          %2619 = vst [vmem:[%s304 + $0x70] sm:$0xff] %v2587
          %2620 = vst [vmem:[%s304 + $0x78] sm:$0xff] %v2588
          %2621 = vst [vmem:[%s304 + $0x80] sm:$0xff] %v2589
          %2622 = vst [vmem:[%s304 + $0x88] sm:$0xff] %v2590
          %2623 = vst [vmem:[%s304 + $0x90] sm:$0xff] %v2591
          %2624 = vst [vmem:[%s304 + $0x98] sm:$0xff] %v2592
          %2625 = vst [vmem:[%s304 + $0xa0] sm:$0xff] %v2593
          %2626 = vst [vmem:[%s304 + $0xa8] sm:$0xff] %v2594
          %2627 = vst [vmem:[%s304 + $0xb0] sm:$0xff] %v2595
          %2628 = vst [vmem:[%s304 + $0xb8] sm:$0xff] %v2596
          %2629 = vst [vmem:[%s304 + $0xc0] sm:$0xff] %v2597
          %2630 = vst [vmem:[%s304 + $0xc8] sm:$0xff] %v2598
          %2631 = vst [vmem:[%s304 + $0xd0] sm:$0xff] %v2599
          %2632 = vst [vmem:[%s304 + $0xd8] sm:$0xff] %v2600
          %2633 = vst [vmem:[%s304 + $0xe0] sm:$0xff] %v2601
          %2634 = vst [vmem:[%s304 + $0xe8] sm:$0xff] %v2602
          %2635 = vst [vmem:[%s304 + $0xf0] sm:$0xff] %v2603
          %2636 = vst [vmem:[%s304 + $0xf8] sm:$0xff] %v2604
        $region52: #{tpu_custom_call.1} parent=31 // pred_fallthru
          _
        %s2637 = sand.u32 %s156, 1
        %s2638 = scalar_lea.sflag [#allocation9], %s2637
        %s2639 = sand.u32 %s156, 1
        %s2640 = smul.addr %s2639, 256
        %s2641 = scalar_lea.vmem [#allocation12], %s2640
        // Predicated region
        $region53: #{tpu_custom_call.1} parent=31 // pred_check
          %p2642 = pneg %p166
        $region54: #{tpu_custom_call.1} parent=31 // pred_check_branch
          %2644 = sbr.rel (%p2642) target = $region56
        $region55: #{tpu_custom_call.1} parent=31 // pred_region
          %s2645 = smul.u32 %s38, 7
          %s2646 = sadd.s32 %s2645, %s39
          %s2647 = sld [smem:[#allocation4 + %s2646]]
          %s2648 = smul.u32 32, %s2647
          %s2650 = ssub.s32 4096, 4096
          %2651 = vsyncadd %s2638, %s2650
          %s2652 = smul.addr %s2648, 128
          %s2653 = scalar_lea.hbm %s6, %s2652
          %s2654 = sshll.u32 %s2641, 4
          %s2655 = int_to_ptr.vmem [resolvable:$true] %s2654
          %2660 = dma.vmem_to_hbm [thread:$0]  %s2655, 4096, %s2653, %s2638, 128, 128, 8
        $region56: #{tpu_custom_call.1} parent=31 // pred_fallthru
          _
      $region32: #{tpu_custom_call.1} parent=5 // pred_fallthru
        _
      %p2661 = scmp.le.s32.totalorder 2, %s29
      // Predicated region
      $region57: #{tpu_custom_call.1} parent=5 // pred_check
        %p2662 = pneg %p2661
      $region58: #{tpu_custom_call.1} parent=5 // pred_check_branch
        %2664 = sbr.rel (%p2662) target = $region60
      $region59: #{tpu_custom_call.1} parent=5 // pred_region
        %s2665 = ssub.s32 %s29, 2
        // Predicated region
        $region61: #{tpu_custom_call.1} parent=59 // pred_check
          %p2666 = pneg %p172
        $region62: #{tpu_custom_call.1} parent=59 // pred_check_branch
          %2668 = sbr.rel (%p2666) target = $region64
        $region63: #{tpu_custom_call.1} parent=59 // pred_region
          %s2669 = sand.u32 %s157, 1
          %s2670 = scalar_lea.sflag [#allocation9], %s2669
          %s2671 = sand.u32 %s157, 1
          %s2672 = smul.addr %s2671, 256
          %s2673 = scalar_lea.vmem [#allocation12], %s2672
          %2674 = dma.done %s2670, 4096
        $region64: #{tpu_custom_call.1} parent=59 // pred_fallthru
          _
      $region60: #{tpu_custom_call.1} parent=5 // pred_fallthru
        _
    $region6: #{tpu_custom_call.1} parent=1 // loop_footer
      %s33 = sadd.s32 1, %s29
    $region7: #{tpu_custom_call.1} parent=1 // loop_footer_branch
      %28 = sbr.rel target = $region3
    $region8: #{tpu_custom_call.1} parent=1 // loop_exit
      _
    %2675 = vsyncpa [#allocation8], 1
    %s2676 = scalar_lea.sflag [#allocation8], 1
    %2677 = vsyncpa %s2676, 1
    %2678 = vsyncpa [#allocation11], 1
    %s2679 = scalar_lea.sflag [#allocation11], 1
    %2680 = vsyncpa %s2679, 1
    %2681 = vsyncpa [#allocation9], 1
    %s2682 = scalar_lea.sflag [#allocation9], 1
    %2683 = vsyncpa %s2682, 1

</llo_original>
